<compile_context>
chip_gen: v7x
topology: tpu7x:2x2x1
jax: 0.10.0
libtpu: 0.0.40
codegen_flags: <defaults>
</compile_context>

<pallas_src>
import functools

import jax
import jax.numpy as jnp
from jax.experimental import pallas as pl
from jax.experimental.pallas import tpu as pltpu


def _round_up(x, m):
    return ((x + m - 1) // m) * m


def _lstm_recurrence_kernel(pre_ref, w_hh_ref, w_out_ref, b_out_ref,
                            out_ref, h_sc, c_sc,
                            *, hidden, block_t, rem_t):
    """Grid: (batch_blocks [parallel], time_blocks [arbitrary]).

    pre_ref:   (Tb, Bb, 4H)  x_t @ W_ih^T + (b_ih + b_hh), time-major, gate-padded
    w_hh_ref:  (H, 4H)       recurrent weight, pre-transposed (H = padded hidden)
    w_out_ref: (H, O)        dense-head weight, pre-transposed (O padded to 128)
    b_out_ref: (1, O)
    out_ref:   (Bb, O)
    h_sc/c_sc: (Bb, H)       state carried across time blocks
    """
    H = hidden
    t_blk = pl.program_id(1)
    last_t = pl.num_programs(1) - 1

    @pl.when(t_blk == 0)
    def _():
        h_sc[...] = jnp.zeros_like(h_sc)
        c_sc[...] = jnp.zeros_like(c_sc)

    # Hoist the recurrent-weight load out of the time loop.
    w_hh = w_hh_ref[...]                                     # (H, 4H)
    acc_t = jnp.float32

    def step(t, carry):
        h, c = carry
        # Only this matmul sits on the serialized per-step path.
        gates = (pre_ref[t].astype(acc_t)
                 + jnp.dot(h.astype(w_hh.dtype), w_hh,
                           preferred_element_type=acc_t))    # (Bb, 4H)
        # PyTorch gate order [i, f, g, o].  Sigmoid only on the i/f/o lanes
        # (g-quadrant sigmoid would be discarded); slices are lane-aligned
        # because H is padded to a multiple of 128.
        if_g = jax.nn.sigmoid(gates[:, 0:2 * H])             # [i | f]
        o_g = jax.nn.sigmoid(gates[:, 3 * H:4 * H])
        g_g = jnp.tanh(gates[:, 2 * H:3 * H])
        c = if_g[:, H:2 * H] * c + if_g[:, 0:H] * g_g
        h = o_g * jnp.tanh(c)
        return (h, c)

    def run_steps(n_steps):
        def body():
            h, c = jax.lax.fori_loop(
                0, n_steps, step, (h_sc[...], c_sc[...]),
                # Partial unroll: overlaps pre_ref[t+1] load / gate adds with
                # the MXU-FIFO pop + EUP latency of step t, amortizes loop
                # overhead, keeps the loop visible to the scheduler.
                unroll=n_steps if n_steps <= 8 else 8)
            h_sc[...] = h
            c_sc[...] = c
        return body

    if rem_t == 0:
        # Every time block is full: single static-trip-count loop.
        run_steps(block_t)()
    else:
        # Full blocks AND the remainder block both keep static trip counts
        # (rem_t is known at trace time); padded timesteps are never executed.
        pl.when(t_blk != last_t)(run_steps(block_t))
        pl.when(t_blk == last_t)(run_steps(rem_t))

    # Fused dense head — only on the final time block: exactly one (lane-dense)
    # writeback per batch block; out_ref stays VMEM-resident across the time axis.
    @pl.when(t_blk == last_t)
    def _():
        out_ref[...] = (
            jnp.dot(h_sc[...], w_out_ref[...], preferred_element_type=acc_t)
            + b_out_ref[...]).astype(out_ref.dtype)


def lstm_model_forward(x, params, *, time_block=128, use_bf16=False):
    """x: (B, T, input_size) float32, batch_first like the PyTorch module."""
    w_ih, w_hh, b_ih, b_hh, w_out, b_out = (
        params["w_ih"], params["w_hh"], params["b_ih"], params["b_hh"],
        params["w_dense"], params["b_dense"])

    B, T, I = x.shape
    H = w_hh.shape[1]                     # w_hh: (4H, H)
    O = w_out.shape[0]                    # w_out: (O, H)

    # ---- padding so every hot-loop slice / store is vreg-aligned -------------
    Gp = _round_up(H, 128)                # per-gate lane width (aligned gate slices)
    Op = _round_up(O, 128)                # lane-dense output store (no vst.msk)

    sub = 16 if use_bf16 else 8           # min sublane group for the pre dtype
    max_bb = 128
    if B > max_bb:
        Bb = max_bb
    elif B > sub:
        # >= 2 batch blocks keeps v7x's 2nd TensorCore busy via the "parallel"
        # batch axis, while M on the per-step recurrent matmul stays >= sub.
        Bb = _round_up(-(-B // 2), sub)
    else:
        Bb = _round_up(B, sub)
    B_pad = _round_up(B, Bb)

    Tb = min(T, time_block)
    T_pad = _round_up(T, Tb)
    rem_t = T % Tb

    # ---- parameter padding: zero-fill keeps padded h/c lanes identically 0 ---
    def pad_gate_rows(w):                 # (4H, ...) -> (4*Gp, ...), per-gate
        w4 = w.reshape(4, H, *w.shape[1:])
        pad = [(0, 0), (0, Gp - H)] + [(0, 0)] * (w.ndim - 1)
        return jnp.pad(w4, pad).reshape(4 * Gp, *w.shape[1:])

    w_ih_p = pad_gate_rows(w_ih)                                      # (4Gp, I)
    bias_p = pad_gate_rows((b_ih + b_hh).reshape(4 * H, 1))[:, 0]     # (4Gp,)
    w_hh_p = pad_gate_rows(jnp.pad(w_hh, ((0, 0), (0, Gp - H))))      # (4Gp, Gp)

    w_hh_t = jnp.transpose(w_hh_p)                                    # (Gp, 4Gp)
    w_out_t = jnp.pad(jnp.transpose(w_out), ((0, Gp - H), (0, Op - O)))  # (Gp, Op)
    b_out2 = jnp.pad(b_out, (0, Op - O)).reshape(1, Op)               # (1, Op)

    # Zero-pad batch (block divisibility) and time (whole grid blocks).
    x_p = jnp.pad(x, ((0, B_pad - B), (0, T_pad - T), (0, 0)))

    # Hoisted input projection: one large MXU matmul over all timesteps, emitted
    # time-major so the kernel reads pre_ref[t] as a ready (Bb, 4Gp) tile;
    # biases folded in once (not per step).
    # TODO(synk): check the HLO — if XLA materializes a standalone HBM transpose
    # of the (B,T,4Gp) product, emit 'btg' and re-block as (Bb, Tb, 4Gp) instead.
    pre = jnp.einsum("bti,gi->tbg", x_p, w_ih_p) + bias_p             # (T_pad, B_pad, 4Gp)

    if use_bf16:
        # Halves HBM/VMEM traffic of the dominant pre array and the W_hh block
        # and doubles MXU rate; accumulation / gate math stay f32.  Off by
        # default: breaks exact f32 parity with the PyTorch module.
        pre = pre.astype(jnp.bfloat16)
        w_hh_t = w_hh_t.astype(jnp.bfloat16)

    n_bblk = B_pad // Bb
    n_tblk = T_pad // Tb

    # Explicit VMEM budget (covers v5e's 16 MiB scoped default and v7x's 64 MiB
    # physical): pre is double-buffered; the weight specs are grid-invariant
    # (constant index_map -> fetched once, buffers still allocated x2).
    itm = 2 if use_bf16 else 4
    vmem_bytes = (2 * Tb * Bb * 4 * Gp * itm        # pre (double-buffered)
                  + 2 * Gp * 4 * Gp * itm           # w_hh
                  + 2 * Gp * Op * 4 + 2 * Op * 4    # w_out + bias
                  + 2 * Bb * Op * 4                 # out block
                  + 2 * Bb * Gp * 4)                # h/c scratch
    vmem_limit = min(100 * 1024 * 1024,
                     max(32 * 1024 * 1024, int(1.5 * vmem_bytes)))

    kernel = functools.partial(_lstm_recurrence_kernel,
                               hidden=Gp, block_t=Tb, rem_t=rem_t)

    out = pl.pallas_call(
        kernel,
        out_shape=jax.ShapeDtypeStruct((B_pad, Op), x.dtype),
        grid_spec=pltpu.PrefetchScalarGridSpec(
            num_scalar_prefetch=0,
            grid=(n_bblk, n_tblk),
            in_specs=[
                # pre_gates, time-major, pipelined per (batch, time) block.
                pl.BlockSpec((Tb, Bb, 4 * Gp), lambda b, t: (t, b, 0)),
                # Grid-invariant weights: constant index_map -> DMA'd once.
                pl.BlockSpec((Gp, 4 * Gp), lambda b, t: (0, 0)),
                pl.BlockSpec((Gp, Op), lambda b, t: (0, 0)),
                pl.BlockSpec((1, Op), lambda b, t: (0, 0)),
            ],
            out_specs=pl.BlockSpec((Bb, Op), lambda b, t: (b, 0)),
            scratch_shapes=[
                pltpu.VMEM((Bb, Gp), jnp.float32),   # h state
                pltpu.VMEM((Bb, Gp), jnp.float32),   # c state
            ],
        ),
        compiler_params=pltpu.CompilerParams(
            dimension_semantics=("parallel", "arbitrary"),
            vmem_limit_bytes=vmem_limit),
    )(pre, w_hh_t, w_out_t, b_out2)
    return out[:B, :O]


def lstm_model_reference(x, params):
    """Pure-JAX reference mirroring torch.nn.LSTM(batch_first=True) + Linear."""
    w_ih, w_hh, b_ih, b_hh, w_out, b_out = (
        params["w_ih"], params["w_hh"], params["b_ih"], params["b_hh"],
        params["w_dense"], params["b_dense"])
    B, T, I = x.shape
    H = w_hh.shape[1]

    def step(carry, x_t):
        h, c = carry
        gates = x_t @ w_ih.T + b_ih + h @ w_hh.T + b_hh
        i = jax.nn.sigmoid(gates[:, 0 * H:1 * H])
        f = jax.nn.sigmoid(gates[:, 1 * H:2 * H])
        g = jnp.tanh(gates[:, 2 * H:3 * H])
        o = jax.nn.sigmoid(gates[:, 3 * H:4 * H])
        c = f * c + i * g
        h = o * jnp.tanh(c)
        return (h, c), h

    h0 = jnp.zeros((B, H), jnp.float32)
    c0 = jnp.zeros((B, H), jnp.float32)
    (h_last, _), _ = jax.lax.scan(step, (h0, c0), jnp.transpose(x, (1, 0, 2)))
    return h_last @ w_out.T + b_out


if __name__ == "__main__":
    # Small shapes consistent with the module's forward.
    B, T = 2, 8
    input_size, hidden_size, output_size = 16, 32, 8

    key = jax.random.PRNGKey(0)
    keys = jax.random.split(key, 8)
    scale = 0.1
    params = {
        "w_ih":    scale * jax.random.normal(keys[0], (4 * hidden_size, input_size), jnp.float32),
        "w_hh":    scale * jax.random.normal(keys[1], (4 * hidden_size, hidden_size), jnp.float32),
        "b_ih":    scale * jax.random.normal(keys[2], (4 * hidden_size,), jnp.float32),
        "b_hh":    scale * jax.random.normal(keys[3], (4 * hidden_size,), jnp.float32),
        "w_dense": scale * jax.random.normal(keys[4], (output_size, hidden_size), jnp.float32),
        "b_dense": scale * jax.random.normal(keys[5], (output_size,), jnp.float32),
    }
    x = jax.random.normal(keys[6], (B, T, input_size), jnp.float32)

    out = jax.block_until_ready(lstm_model_forward(x, params))
    ref = jax.block_until_ready(lstm_model_reference(x, params))

    assert out.shape == (B, output_size)
    assert jnp.allclose(out, ref, atol=1e-5, rtol=1e-5), (out, ref)

    print("KERNEL_OK")
</pallas_src>

<mosaic_0001>
module attributes {stable_mosaic.version = 11 : i64} {
  func.func @_lstm_recurrence_kernel(%arg0: i32, %arg1: i32, %arg2: memref<8x8x512xf32, #tpu.memory_space<vmem>>, %arg3: memref<128x512xf32, #tpu.memory_space<vmem>>, %arg4: memref<128x128xf32, #tpu.memory_space<vmem>>, %arg5: memref<1x128xf32, #tpu.memory_space<vmem>>, %arg6: memref<8x128xf32, #tpu.memory_space<vmem>>, %arg7: memref<8x128xf32, #tpu.memory_space<vmem>>, %arg8: memref<8x128xf32, #tpu.memory_space<vmem>>) attributes {dimension_semantics = [#tpu.dimension_semantics<parallel>, #tpu.dimension_semantics<arbitrary>], iteration_bounds = array<i64: 1, 1>, scalar_prefetch = 0 : i64, scratch_operands = 2 : i64, tpu.core_type = #tpu.core_type<tc>, window_params = [{transform_indices = @transform_0, window_bounds = array<i64: 8, 8, 512>}, {pipeline_mode = #tpu.pipeline_mode<synchronous>, transform_indices = @transform_1, window_bounds = array<i64: 128, 512>}, {pipeline_mode = #tpu.pipeline_mode<synchronous>, transform_indices = @transform_2, window_bounds = array<i64: 128, 128>}, {pipeline_mode = #tpu.pipeline_mode<synchronous>, transform_indices = @transform_3, window_bounds = array<i64: 1, 128>}, {transform_indices = @transform_4, window_bounds = array<i64: 8, 128>}]} {
    %c0_i32 = arith.constant 0 : i32
    %0 = arith.cmpi eq, %arg1, %c0_i32 : i32
    %1 = arith.extui %0 : i1 to i32
    %c0_i32_0 = arith.constant 0 : i32
    %2 = arith.cmpi ne, %1, %c0_i32_0 : i32
    scf.if %2 {
      %cst_52 = arith.constant 0.000000e+00 : f32
      %219 = vector.broadcast %cst_52 : f32 to vector<8x128xf32>
      %c0_53 = arith.constant 0 : index
      %c0_54 = arith.constant 0 : index
      %220 = vector.load %arg7[%c0_53, %c0_54] : memref<8x128xf32, #tpu.memory_space<vmem>>, vector<8x128xf32>
      tpu.vector_store %arg7[%c0_53, %c0_54], %219 {strides = array<i32>} : memref<8x128xf32, #tpu.memory_space<vmem>>, vector<8x128xf32>,
      %cst_55 = arith.constant 0.000000e+00 : f32
      %221 = vector.broadcast %cst_55 : f32 to vector<8x128xf32>
      %c0_56 = arith.constant 0 : index
      %c0_57 = arith.constant 0 : index
      %222 = vector.load %arg8[%c0_56, %c0_57] : memref<8x128xf32, #tpu.memory_space<vmem>>, vector<8x128xf32>
      tpu.vector_store %arg8[%c0_56, %c0_57], %221 {strides = array<i32>} : memref<8x128xf32, #tpu.memory_space<vmem>>, vector<8x128xf32>,
    } else {
    }
    %c0 = arith.constant 0 : index
    %c0_1 = arith.constant 0 : index
    %3 = vector.load %arg3[%c0, %c0_1] : memref<128x512xf32, #tpu.memory_space<vmem>>, vector<128x512xf32>
    %c0_2 = arith.constant 0 : index
    %c0_3 = arith.constant 0 : index
    %4 = vector.load %arg7[%c0_2, %c0_3] : memref<8x128xf32, #tpu.memory_space<vmem>>, vector<8x128xf32>
    %c0_4 = arith.constant 0 : index
    %c0_5 = arith.constant 0 : index
    %5 = vector.load %arg8[%c0_4, %c0_5] : memref<8x128xf32, #tpu.memory_space<vmem>>, vector<8x128xf32>
    %c0_i32_6 = arith.constant 0 : i32
    %6 = arith.index_cast %c0_i32_6 : i32 to index
    %c0_7 = arith.constant 0 : index
    %c0_8 = arith.constant 0 : index
    %7 = vector.load %arg2[%6, %c0_7, %c0_8] : memref<8x8x512xf32, #tpu.memory_space<vmem>>, vector<1x8x512xf32>
    %8 = vector.shape_cast %7 : vector<1x8x512xf32> to vector<8x512xf32>
    %cst = arith.constant dense<0.000000e+00> : vector<8x512xf32>
    %9 = tpu.matmul %4, %3, %cst {dimension_numbers = #tpu.dot_dimension_numbers<[1], [0], [0], [1], [0, 0, 1, 1], [], []>} : vector<8x128xf32>, vector<128x512xf32>, vector<8x512xf32> -> vector<8x512xf32>
    %10 = arith.addf %8, %9 : vector<8x512xf32>
    %11 = vector.extract_strided_slice %10 {offsets = [0, 0], sizes = [8, 256], strides = [1, 1]} : vector<8x512xf32> to vector<8x256xf32>
    %12 = arith.negf %11 : vector<8x256xf32>
    %13 = math.exp %12 : vector<8x256xf32>
    %cst_9 = arith.constant 1.000000e+00 : f32
    %14 = vector.broadcast %cst_9 : f32 to vector<8x256xf32>
    %15 = arith.addf %14, %13 : vector<8x256xf32>
    %16 = arith.divf %14, %15 : vector<8x256xf32>
    %17 = vector.extract_strided_slice %10 {offsets = [0, 384], sizes = [8, 128], strides = [1, 1]} : vector<8x512xf32> to vector<8x128xf32>
    %18 = arith.negf %17 : vector<8x128xf32>
    %19 = math.exp %18 : vector<8x128xf32>
    %cst_10 = arith.constant 1.000000e+00 : f32
    %20 = vector.broadcast %cst_10 : f32 to vector<8x128xf32>
    %21 = arith.addf %20, %19 : vector<8x128xf32>
    %22 = arith.divf %20, %21 : vector<8x128xf32>
    %23 = vector.extract_strided_slice %10 {offsets = [0, 256], sizes = [8, 128], strides = [1, 1]} : vector<8x512xf32> to vector<8x128xf32>
    %24 = math.tanh %23 : vector<8x128xf32>
    %25 = vector.extract_strided_slice %16 {offsets = [0, 128], sizes = [8, 128], strides = [1, 1]} : vector<8x256xf32> to vector<8x128xf32>
    %26 = arith.mulf %25, %5 : vector<8x128xf32>
    %27 = vector.extract_strided_slice %16 {offsets = [0, 0], sizes = [8, 128], strides = [1, 1]} : vector<8x256xf32> to vector<8x128xf32>
    %28 = arith.mulf %27, %24 : vector<8x128xf32>
    %29 = arith.addf %26, %28 : vector<8x128xf32>
    %30 = math.tanh %29 : vector<8x128xf32>
    %31 = arith.mulf %22, %30 : vector<8x128xf32>
    %c1_i32 = arith.constant 1 : i32
    %32 = arith.index_cast %c1_i32 : i32 to index
    %c0_11 = arith.constant 0 : index
    %c0_12 = arith.constant 0 : index
    %33 = vector.load %arg2[%32, %c0_11, %c0_12] : memref<8x8x512xf32, #tpu.memory_space<vmem>>, vector<1x8x512xf32>
    %34 = vector.shape_cast %33 : vector<1x8x512xf32> to vector<8x512xf32>
    %cst_13 = arith.constant dense<0.000000e+00> : vector<8x512xf32>
    %35 = tpu.matmul %31, %3, %cst_13 {dimension_numbers = #tpu.dot_dimension_numbers<[1], [0], [0], [1], [0, 0, 1, 1], [], []>} : vector<8x128xf32>, vector<128x512xf32>, vector<8x512xf32> -> vector<8x512xf32>
    %36 = arith.addf %34, %35 : vector<8x512xf32>
    %37 = vector.extract_strided_slice %36 {offsets = [0, 0], sizes = [8, 256], strides = [1, 1]} : vector<8x512xf32> to vector<8x256xf32>
    %38 = arith.negf %37 : vector<8x256xf32>
    %39 = math.exp %38 : vector<8x256xf32>
    %cst_14 = arith.constant 1.000000e+00 : f32
    %40 = vector.broadcast %cst_14 : f32 to vector<8x256xf32>
    %41 = arith.addf %40, %39 : vector<8x256xf32>
    %42 = arith.divf %40, %41 : vector<8x256xf32>
    %43 = vector.extract_strided_slice %36 {offsets = [0, 384], sizes = [8, 128], strides = [1, 1]} : vector<8x512xf32> to vector<8x128xf32>
    %44 = arith.negf %43 : vector<8x128xf32>
    %45 = math.exp %44 : vector<8x128xf32>
    %cst_15 = arith.constant 1.000000e+00 : f32
    %46 = vector.broadcast %cst_15 : f32 to vector<8x128xf32>
    %47 = arith.addf %46, %45 : vector<8x128xf32>
    %48 = arith.divf %46, %47 : vector<8x128xf32>
    %49 = vector.extract_strided_slice %36 {offsets = [0, 256], sizes = [8, 128], strides = [1, 1]} : vector<8x512xf32> to vector<8x128xf32>
    %50 = math.tanh %49 : vector<8x128xf32>
    %51 = vector.extract_strided_slice %42 {offsets = [0, 128], sizes = [8, 128], strides = [1, 1]} : vector<8x256xf32> to vector<8x128xf32>
    %52 = arith.mulf %51, %29 : vector<8x128xf32>
    %53 = vector.extract_strided_slice %42 {offsets = [0, 0], sizes = [8, 128], strides = [1, 1]} : vector<8x256xf32> to vector<8x128xf32>
    %54 = arith.mulf %53, %50 : vector<8x128xf32>
    %55 = arith.addf %52, %54 : vector<8x128xf32>
    %56 = math.tanh %55 : vector<8x128xf32>
    %57 = arith.mulf %48, %56 : vector<8x128xf32>
    %c2_i32 = arith.constant 2 : i32
    %58 = arith.index_cast %c2_i32 : i32 to index
    %c0_16 = arith.constant 0 : index
    %c0_17 = arith.constant 0 : index
    %59 = vector.load %arg2[%58, %c0_16, %c0_17] : memref<8x8x512xf32, #tpu.memory_space<vmem>>, vector<1x8x512xf32>
    %60 = vector.shape_cast %59 : vector<1x8x512xf32> to vector<8x512xf32>
    %cst_18 = arith.constant dense<0.000000e+00> : vector<8x512xf32>
    %61 = tpu.matmul %57, %3, %cst_18 {dimension_numbers = #tpu.dot_dimension_numbers<[1], [0], [0], [1], [0, 0, 1, 1], [], []>} : vector<8x128xf32>, vector<128x512xf32>, vector<8x512xf32> -> vector<8x512xf32>
    %62 = arith.addf %60, %61 : vector<8x512xf32>
    %63 = vector.extract_strided_slice %62 {offsets = [0, 0], sizes = [8, 256], strides = [1, 1]} : vector<8x512xf32> to vector<8x256xf32>
    %64 = arith.negf %63 : vector<8x256xf32>
    %65 = math.exp %64 : vector<8x256xf32>
    %cst_19 = arith.constant 1.000000e+00 : f32
    %66 = vector.broadcast %cst_19 : f32 to vector<8x256xf32>
    %67 = arith.addf %66, %65 : vector<8x256xf32>
    %68 = arith.divf %66, %67 : vector<8x256xf32>
    %69 = vector.extract_strided_slice %62 {offsets = [0, 384], sizes = [8, 128], strides = [1, 1]} : vector<8x512xf32> to vector<8x128xf32>
    %70 = arith.negf %69 : vector<8x128xf32>
    %71 = math.exp %70 : vector<8x128xf32>
    %cst_20 = arith.constant 1.000000e+00 : f32
    %72 = vector.broadcast %cst_20 : f32 to vector<8x128xf32>
    %73 = arith.addf %72, %71 : vector<8x128xf32>
    %74 = arith.divf %72, %73 : vector<8x128xf32>
    %75 = vector.extract_strided_slice %62 {offsets = [0, 256], sizes = [8, 128], strides = [1, 1]} : vector<8x512xf32> to vector<8x128xf32>
    %76 = math.tanh %75 : vector<8x128xf32>
    %77 = vector.extract_strided_slice %68 {offsets = [0, 128], sizes = [8, 128], strides = [1, 1]} : vector<8x256xf32> to vector<8x128xf32>
    %78 = arith.mulf %77, %55 : vector<8x128xf32>
    %79 = vector.extract_strided_slice %68 {offsets = [0, 0], sizes = [8, 128], strides = [1, 1]} : vector<8x256xf32> to vector<8x128xf32>
    %80 = arith.mulf %79, %76 : vector<8x128xf32>
    %81 = arith.addf %78, %80 : vector<8x128xf32>
    %82 = math.tanh %81 : vector<8x128xf32>
    %83 = arith.mulf %74, %82 : vector<8x128xf32>
    %c3_i32 = arith.constant 3 : i32
    %84 = arith.index_cast %c3_i32 : i32 to index
    %c0_21 = arith.constant 0 : index
    %c0_22 = arith.constant 0 : index
    %85 = vector.load %arg2[%84, %c0_21, %c0_22] : memref<8x8x512xf32, #tpu.memory_space<vmem>>, vector<1x8x512xf32>
    %86 = vector.shape_cast %85 : vector<1x8x512xf32> to vector<8x512xf32>
    %cst_23 = arith.constant dense<0.000000e+00> : vector<8x512xf32>
    %87 = tpu.matmul %83, %3, %cst_23 {dimension_numbers = #tpu.dot_dimension_numbers<[1], [0], [0], [1], [0, 0, 1, 1], [], []>} : vector<8x128xf32>, vector<128x512xf32>, vector<8x512xf32> -> vector<8x512xf32>
    %88 = arith.addf %86, %87 : vector<8x512xf32>
    %89 = vector.extract_strided_slice %88 {offsets = [0, 0], sizes = [8, 256], strides = [1, 1]} : vector<8x512xf32> to vector<8x256xf32>
    %90 = arith.negf %89 : vector<8x256xf32>
    %91 = math.exp %90 : vector<8x256xf32>
    %cst_24 = arith.constant 1.000000e+00 : f32
    %92 = vector.broadcast %cst_24 : f32 to vector<8x256xf32>
    %93 = arith.addf %92, %91 : vector<8x256xf32>
    %94 = arith.divf %92, %93 : vector<8x256xf32>
    %95 = vector.extract_strided_slice %88 {offsets = [0, 384], sizes = [8, 128], strides = [1, 1]} : vector<8x512xf32> to vector<8x128xf32>
    %96 = arith.negf %95 : vector<8x128xf32>
    %97 = math.exp %96 : vector<8x128xf32>
    %cst_25 = arith.constant 1.000000e+00 : f32
    %98 = vector.broadcast %cst_25 : f32 to vector<8x128xf32>
    %99 = arith.addf %98, %97 : vector<8x128xf32>
    %100 = arith.divf %98, %99 : vector<8x128xf32>
    %101 = vector.extract_strided_slice %88 {offsets = [0, 256], sizes = [8, 128], strides = [1, 1]} : vector<8x512xf32> to vector<8x128xf32>
    %102 = math.tanh %101 : vector<8x128xf32>
    %103 = vector.extract_strided_slice %94 {offsets = [0, 128], sizes = [8, 128], strides = [1, 1]} : vector<8x256xf32> to vector<8x128xf32>
    %104 = arith.mulf %103, %81 : vector<8x128xf32>
    %105 = vector.extract_strided_slice %94 {offsets = [0, 0], sizes = [8, 128], strides = [1, 1]} : vector<8x256xf32> to vector<8x128xf32>
    %106 = arith.mulf %105, %102 : vector<8x128xf32>
    %107 = arith.addf %104, %106 : vector<8x128xf32>
    %108 = math.tanh %107 : vector<8x128xf32>
    %109 = arith.mulf %100, %108 : vector<8x128xf32>
    %c4_i32 = arith.constant 4 : i32
    %110 = arith.index_cast %c4_i32 : i32 to index
    %c0_26 = arith.constant 0 : index
    %c0_27 = arith.constant 0 : index
    %111 = vector.load %arg2[%110, %c0_26, %c0_27] : memref<8x8x512xf32, #tpu.memory_space<vmem>>, vector<1x8x512xf32>
    %112 = vector.shape_cast %111 : vector<1x8x512xf32> to vector<8x512xf32>
    %cst_28 = arith.constant dense<0.000000e+00> : vector<8x512xf32>
    %113 = tpu.matmul %109, %3, %cst_28 {dimension_numbers = #tpu.dot_dimension_numbers<[1], [0], [0], [1], [0, 0, 1, 1], [], []>} : vector<8x128xf32>, vector<128x512xf32>, vector<8x512xf32> -> vector<8x512xf32>
    %114 = arith.addf %112, %113 : vector<8x512xf32>
    %115 = vector.extract_strided_slice %114 {offsets = [0, 0], sizes = [8, 256], strides = [1, 1]} : vector<8x512xf32> to vector<8x256xf32>
    %116 = arith.negf %115 : vector<8x256xf32>
    %117 = math.exp %116 : vector<8x256xf32>
    %cst_29 = arith.constant 1.000000e+00 : f32
    %118 = vector.broadcast %cst_29 : f32 to vector<8x256xf32>
    %119 = arith.addf %118, %117 : vector<8x256xf32>
    %120 = arith.divf %118, %119 : vector<8x256xf32>
    %121 = vector.extract_strided_slice %114 {offsets = [0, 384], sizes = [8, 128], strides = [1, 1]} : vector<8x512xf32> to vector<8x128xf32>
    %122 = arith.negf %121 : vector<8x128xf32>
    %123 = math.exp %122 : vector<8x128xf32>
    %cst_30 = arith.constant 1.000000e+00 : f32
    %124 = vector.broadcast %cst_30 : f32 to vector<8x128xf32>
    %125 = arith.addf %124, %123 : vector<8x128xf32>
    %126 = arith.divf %124, %125 : vector<8x128xf32>
    %127 = vector.extract_strided_slice %114 {offsets = [0, 256], sizes = [8, 128], strides = [1, 1]} : vector<8x512xf32> to vector<8x128xf32>
    %128 = math.tanh %127 : vector<8x128xf32>
    %129 = vector.extract_strided_slice %120 {offsets = [0, 128], sizes = [8, 128], strides = [1, 1]} : vector<8x256xf32> to vector<8x128xf32>
    %130 = arith.mulf %129, %107 : vector<8x128xf32>
    %131 = vector.extract_strided_slice %120 {offsets = [0, 0], sizes = [8, 128], strides = [1, 1]} : vector<8x256xf32> to vector<8x128xf32>
    %132 = arith.mulf %131, %128 : vector<8x128xf32>
    %133 = arith.addf %130, %132 : vector<8x128xf32>
    %134 = math.tanh %133 : vector<8x128xf32>
    %135 = arith.mulf %126, %134 : vector<8x128xf32>
    %c5_i32 = arith.constant 5 : i32
    %136 = arith.index_cast %c5_i32 : i32 to index
    %c0_31 = arith.constant 0 : index
    %c0_32 = arith.constant 0 : index
    %137 = vector.load %arg2[%136, %c0_31, %c0_32] : memref<8x8x512xf32, #tpu.memory_space<vmem>>, vector<1x8x512xf32>
    %138 = vector.shape_cast %137 : vector<1x8x512xf32> to vector<8x512xf32>
    %cst_33 = arith.constant dense<0.000000e+00> : vector<8x512xf32>
    %139 = tpu.matmul %135, %3, %cst_33 {dimension_numbers = #tpu.dot_dimension_numbers<[1], [0], [0], [1], [0, 0, 1, 1], [], []>} : vector<8x128xf32>, vector<128x512xf32>, vector<8x512xf32> -> vector<8x512xf32>
    %140 = arith.addf %138, %139 : vector<8x512xf32>
    %141 = vector.extract_strided_slice %140 {offsets = [0, 0], sizes = [8, 256], strides = [1, 1]} : vector<8x512xf32> to vector<8x256xf32>
    %142 = arith.negf %141 : vector<8x256xf32>
    %143 = math.exp %142 : vector<8x256xf32>
    %cst_34 = arith.constant 1.000000e+00 : f32
    %144 = vector.broadcast %cst_34 : f32 to vector<8x256xf32>
    %145 = arith.addf %144, %143 : vector<8x256xf32>
    %146 = arith.divf %144, %145 : vector<8x256xf32>
    %147 = vector.extract_strided_slice %140 {offsets = [0, 384], sizes = [8, 128], strides = [1, 1]} : vector<8x512xf32> to vector<8x128xf32>
    %148 = arith.negf %147 : vector<8x128xf32>
    %149 = math.exp %148 : vector<8x128xf32>
    %cst_35 = arith.constant 1.000000e+00 : f32
    %150 = vector.broadcast %cst_35 : f32 to vector<8x128xf32>
    %151 = arith.addf %150, %149 : vector<8x128xf32>
    %152 = arith.divf %150, %151 : vector<8x128xf32>
    %153 = vector.extract_strided_slice %140 {offsets = [0, 256], sizes = [8, 128], strides = [1, 1]} : vector<8x512xf32> to vector<8x128xf32>
    %154 = math.tanh %153 : vector<8x128xf32>
    %155 = vector.extract_strided_slice %146 {offsets = [0, 128], sizes = [8, 128], strides = [1, 1]} : vector<8x256xf32> to vector<8x128xf32>
    %156 = arith.mulf %155, %133 : vector<8x128xf32>
    %157 = vector.extract_strided_slice %146 {offsets = [0, 0], sizes = [8, 128], strides = [1, 1]} : vector<8x256xf32> to vector<8x128xf32>
    %158 = arith.mulf %157, %154 : vector<8x128xf32>
    %159 = arith.addf %156, %158 : vector<8x128xf32>
    %160 = math.tanh %159 : vector<8x128xf32>
    %161 = arith.mulf %152, %160 : vector<8x128xf32>
    %c6_i32 = arith.constant 6 : i32
    %162 = arith.index_cast %c6_i32 : i32 to index
    %c0_36 = arith.constant 0 : index
    %c0_37 = arith.constant 0 : index
    %163 = vector.load %arg2[%162, %c0_36, %c0_37] : memref<8x8x512xf32, #tpu.memory_space<vmem>>, vector<1x8x512xf32>
    %164 = vector.shape_cast %163 : vector<1x8x512xf32> to vector<8x512xf32>
    %cst_38 = arith.constant dense<0.000000e+00> : vector<8x512xf32>
    %165 = tpu.matmul %161, %3, %cst_38 {dimension_numbers = #tpu.dot_dimension_numbers<[1], [0], [0], [1], [0, 0, 1, 1], [], []>} : vector<8x128xf32>, vector<128x512xf32>, vector<8x512xf32> -> vector<8x512xf32>
    %166 = arith.addf %164, %165 : vector<8x512xf32>
    %167 = vector.extract_strided_slice %166 {offsets = [0, 0], sizes = [8, 256], strides = [1, 1]} : vector<8x512xf32> to vector<8x256xf32>
    %168 = arith.negf %167 : vector<8x256xf32>
    %169 = math.exp %168 : vector<8x256xf32>
    %cst_39 = arith.constant 1.000000e+00 : f32
    %170 = vector.broadcast %cst_39 : f32 to vector<8x256xf32>
    %171 = arith.addf %170, %169 : vector<8x256xf32>
    %172 = arith.divf %170, %171 : vector<8x256xf32>
    %173 = vector.extract_strided_slice %166 {offsets = [0, 384], sizes = [8, 128], strides = [1, 1]} : vector<8x512xf32> to vector<8x128xf32>
    %174 = arith.negf %173 : vector<8x128xf32>
    %175 = math.exp %174 : vector<8x128xf32>
    %cst_40 = arith.constant 1.000000e+00 : f32
    %176 = vector.broadcast %cst_40 : f32 to vector<8x128xf32>
    %177 = arith.addf %176, %175 : vector<8x128xf32>
    %178 = arith.divf %176, %177 : vector<8x128xf32>
    %179 = vector.extract_strided_slice %166 {offsets = [0, 256], sizes = [8, 128], strides = [1, 1]} : vector<8x512xf32> to vector<8x128xf32>
    %180 = math.tanh %179 : vector<8x128xf32>
    %181 = vector.extract_strided_slice %172 {offsets = [0, 128], sizes = [8, 128], strides = [1, 1]} : vector<8x256xf32> to vector<8x128xf32>
    %182 = arith.mulf %181, %159 : vector<8x128xf32>
    %183 = vector.extract_strided_slice %172 {offsets = [0, 0], sizes = [8, 128], strides = [1, 1]} : vector<8x256xf32> to vector<8x128xf32>
    %184 = arith.mulf %183, %180 : vector<8x128xf32>
    %185 = arith.addf %182, %184 : vector<8x128xf32>
    %186 = math.tanh %185 : vector<8x128xf32>
    %187 = arith.mulf %178, %186 : vector<8x128xf32>
    %c7_i32 = arith.constant 7 : i32
    %188 = arith.index_cast %c7_i32 : i32 to index
    %c0_41 = arith.constant 0 : index
    %c0_42 = arith.constant 0 : index
    %189 = vector.load %arg2[%188, %c0_41, %c0_42] : memref<8x8x512xf32, #tpu.memory_space<vmem>>, vector<1x8x512xf32>
    %190 = vector.shape_cast %189 : vector<1x8x512xf32> to vector<8x512xf32>
    %cst_43 = arith.constant dense<0.000000e+00> : vector<8x512xf32>
    %191 = tpu.matmul %187, %3, %cst_43 {dimension_numbers = #tpu.dot_dimension_numbers<[1], [0], [0], [1], [0, 0, 1, 1], [], []>} : vector<8x128xf32>, vector<128x512xf32>, vector<8x512xf32> -> vector<8x512xf32>
    %192 = arith.addf %190, %191 : vector<8x512xf32>
    %193 = vector.extract_strided_slice %192 {offsets = [0, 0], sizes = [8, 256], strides = [1, 1]} : vector<8x512xf32> to vector<8x256xf32>
    %194 = arith.negf %193 : vector<8x256xf32>
    %195 = math.exp %194 : vector<8x256xf32>
    %cst_44 = arith.constant 1.000000e+00 : f32
    %196 = vector.broadcast %cst_44 : f32 to vector<8x256xf32>
    %197 = arith.addf %196, %195 : vector<8x256xf32>
    %198 = arith.divf %196, %197 : vector<8x256xf32>
    %199 = vector.extract_strided_slice %192 {offsets = [0, 384], sizes = [8, 128], strides = [1, 1]} : vector<8x512xf32> to vector<8x128xf32>
    %200 = arith.negf %199 : vector<8x128xf32>
    %201 = math.exp %200 : vector<8x128xf32>
    %cst_45 = arith.constant 1.000000e+00 : f32
    %202 = vector.broadcast %cst_45 : f32 to vector<8x128xf32>
    %203 = arith.addf %202, %201 : vector<8x128xf32>
    %204 = arith.divf %202, %203 : vector<8x128xf32>
    %205 = vector.extract_strided_slice %192 {offsets = [0, 256], sizes = [8, 128], strides = [1, 1]} : vector<8x512xf32> to vector<8x128xf32>
    %206 = math.tanh %205 : vector<8x128xf32>
    %207 = vector.extract_strided_slice %198 {offsets = [0, 128], sizes = [8, 128], strides = [1, 1]} : vector<8x256xf32> to vector<8x128xf32>
    %208 = arith.mulf %207, %185 : vector<8x128xf32>
    %209 = vector.extract_strided_slice %198 {offsets = [0, 0], sizes = [8, 128], strides = [1, 1]} : vector<8x256xf32> to vector<8x128xf32>
    %210 = arith.mulf %209, %206 : vector<8x128xf32>
    %211 = arith.addf %208, %210 : vector<8x128xf32>
    %212 = math.tanh %211 : vector<8x128xf32>
    %213 = arith.mulf %204, %212 : vector<8x128xf32>
    %c8_i32 = arith.constant 8 : i32
    %c0_46 = arith.constant 0 : index
    %c0_47 = arith.constant 0 : index
    %214 = vector.load %arg7[%c0_46, %c0_47] : memref<8x128xf32, #tpu.memory_space<vmem>>, vector<8x128xf32>
    tpu.vector_store %arg7[%c0_46, %c0_47], %213 {strides = array<i32>} : memref<8x128xf32, #tpu.memory_space<vmem>>, vector<8x128xf32>,
    %c0_48 = arith.constant 0 : index
    %c0_49 = arith.constant 0 : index
    %215 = vector.load %arg8[%c0_48, %c0_49] : memref<8x128xf32, #tpu.memory_space<vmem>>, vector<8x128xf32>
    tpu.vector_store %arg8[%c0_48, %c0_49], %211 {strides = array<i32>} : memref<8x128xf32, #tpu.memory_space<vmem>>, vector<8x128xf32>,
    %c0_i32_50 = arith.constant 0 : i32
    %216 = arith.cmpi eq, %arg1, %c0_i32_50 : i32
    %217 = arith.extui %216 : i1 to i32
    %c0_i32_51 = arith.constant 0 : i32
    %218 = arith.cmpi ne, %217, %c0_i32_51 : i32
    scf.if %218 {
      %c0_52 = arith.constant 0 : index
      %c0_53 = arith.constant 0 : index
      %219 = vector.load %arg7[%c0_52, %c0_53] : memref<8x128xf32, #tpu.memory_space<vmem>>, vector<8x128xf32>
      %c0_54 = arith.constant 0 : index
      %c0_55 = arith.constant 0 : index
      %220 = vector.load %arg4[%c0_54, %c0_55] : memref<128x128xf32, #tpu.memory_space<vmem>>, vector<128x128xf32>
      %cst_56 = arith.constant dense<0.000000e+00> : vector<8x128xf32>
      %221 = tpu.matmul %219, %220, %cst_56 {dimension_numbers = #tpu.dot_dimension_numbers<[1], [0], [0], [1], [0, 0, 1, 1], [], []>} : vector<8x128xf32>, vector<128x128xf32>, vector<8x128xf32> -> vector<8x128xf32>
      %c0_57 = arith.constant 0 : index
      %c0_58 = arith.constant 0 : index
      %222 = vector.load %arg5[%c0_57, %c0_58] : memref<1x128xf32, #tpu.memory_space<vmem>>, vector<1x128xf32>
      %223 = vector.broadcast %222 : vector<1x128xf32> to vector<8x128xf32>
      %224 = arith.addf %221, %223 : vector<8x128xf32>
      %c0_59 = arith.constant 0 : index
      %c0_60 = arith.constant 0 : index
      %225 = vector.load %arg6[%c0_59, %c0_60] : memref<8x128xf32, #tpu.memory_space<vmem>>, vector<8x128xf32>
      tpu.vector_store %arg6[%c0_59, %c0_60], %224 {strides = array<i32>} : memref<8x128xf32, #tpu.memory_space<vmem>>, vector<8x128xf32>,
    } else {
    }
    return
  }
  func.func @transform_0(%arg0: i32, %arg1: i32) -> (i32, i32, i32) {
    %c0_i32 = arith.constant 0 : i32
    %c0_i32_0 = arith.constant 0 : i32
    return %arg1, %arg0, %c0_i32 : i32, i32, i32
  }
  func.func @transform_1(%arg0: i32, %arg1: i32) -> (i32, i32) {
    %c0_i32 = arith.constant 0 : i32
    %c0_i32_0 = arith.constant 0 : i32
    %c0_i32_1 = arith.constant 0 : i32
    return %c0_i32, %c0_i32_0 : i32, i32
  }
  func.func @transform_2(%arg0: i32, %arg1: i32) -> (i32, i32) {
    %c0_i32 = arith.constant 0 : i32
    %c0_i32_0 = arith.constant 0 : i32
    %c0_i32_1 = arith.constant 0 : i32
    return %c0_i32, %c0_i32_0 : i32, i32
  }
  func.func @transform_3(%arg0: i32, %arg1: i32) -> (i32, i32) {
    %c0_i32 = arith.constant 0 : i32
    %c0_i32_0 = arith.constant 0 : i32
    %c0_i32_1 = arith.constant 0 : i32
    return %c0_i32, %c0_i32_0 : i32, i32
  }
  func.func @transform_4(%arg0: i32, %arg1: i32) -> (i32, i32) {
    %c0_i32 = arith.constant 0 : i32
    %c0_i32_0 = arith.constant 0 : i32
    return %arg0, %c0_i32 : i32, i32
  }
}

</mosaic_0001>

<llo_original>
// kernel: tpu_custom_call.1
$region0: #{tpu_custom_call.1}
  #allocation0 [shape = 'u32[]', space=smem, size = 0x4, offset = 0x4, fixed_abs, tag = 'smem constant byte address 0x4 - core index']
  #allocation1 [shape = 'u32[144,128]{1,0:T(1,128)}', space=vmem, size = 0x12000, scoped, tag = 'internal scratch']
  #allocation2 [shape = 'f32[8,128]{1,0:T(8,128)}', space=vmem, size = 0x1000, scoped, tag = 'scratch operand']
  #allocation3 [shape = 'f32[8,128]{1,0:T(8,128)}', space=vmem, size = 0x1000, scoped, tag = 'scratch operand']
  %s0 = inlined_call_operand.hbm [shape: f32[8,8,512], index: 0, kind: input, shape index: {}]
  %s1 = inlined_call_operand.hbm [shape: f32[128,512], index: 1, kind: input, shape index: {}]
  %s2 = inlined_call_operand.hbm [shape: f32[128,128], index: 2, kind: input, shape index: {}]
  %s3 = inlined_call_operand.vmem [shape: f32[1,128], index: 3, kind: input, shape index: {}]
  %s4 = inlined_call_operand.hbm [shape: f32[8,128], index: 4, kind: output, shape index: {}]
  %s5 = sld [smem:[#allocation0]]
  $region46: #{tpu_custom_call.1} parent=0
    _
  %s7 = ssub.s32 1, %s5
  %s8 = scalar_select 0, %s7, %s5
  $region1: #{tpu_custom_call.1} parent=0
    #allocation4 [shape = 'u8[131072]{0}', space=vmem, size = 0x20000, scoped, tag = 'input window, operand 0, single buffered']
    #allocation5 [shape = 's32[1]{0}', space=sflag, size = 0x4, scoped, tag = 'scoped memory for tpu_custom_call.1']
    #allocation6 [shape = 's32[1]{0}', space=sflag, size = 0x4, scoped, tag = 'scoped memory for tpu_custom_call.1']
    #allocation7 [shape = 'u8[262144]{0}', space=vmem, size = 0x40000, scoped, tag = 'input window, operand 1, single buffered']
    #allocation8 [shape = 's32[1]{0}', space=sflag, size = 0x4, scoped, tag = 'scoped memory for tpu_custom_call.1']
    #allocation9 [shape = 'u8[65536]{0}', space=vmem, size = 0x10000, scoped, tag = 'input window, operand 2, single buffered']
    #allocation10 [shape = 'u8[4096]{0}', space=vmem, size = 0x1000, scoped, tag = 'output window, operand 0, single buffered']
    %9 = vsyncpa [#allocation5], 0
    %10 = vsyncpa [#allocation8], 0
    %11 = vsyncpa [#allocation6], 0
    // Predicated region
    $region2: #{tpu_custom_call.1} parent=1 // pred_check
      _
    $region3: #{tpu_custom_call.1} parent=1 // pred_check_branch
      %13 = sbr.rel (0) target = $region5
    $region4: #{tpu_custom_call.1} parent=1 // pred_region
      %s15 = ssub.s32 4096, 4096
      %16 = vsyncadd [#allocation5], %s15
      %s17 = sshll.u32 [#allocation4], 4
      %s18 = int_to_ptr.vmem [resolvable:$true] %s17
      %23 = dma.hbm_to_vmem [thread:$0]  %s0, 4096, %s18, [#allocation5], 512, 512, 32
    $region5: #{tpu_custom_call.1} parent=1 // pred_fallthru
      _
    // Predicated region
    $region6: #{tpu_custom_call.1} parent=1 // pred_check
      _
    $region7: #{tpu_custom_call.1} parent=1 // pred_check_branch
      %25 = sbr.rel (0) target = $region9
    $region8: #{tpu_custom_call.1} parent=1 // pred_region
      %s27 = ssub.s32 8192, 8192
      %28 = vsyncadd [#allocation8], %s27
      %s29 = sshll.u32 [#allocation7], 4
      %s30 = int_to_ptr.vmem [resolvable:$true] %s29
      %35 = dma.hbm_to_vmem [thread:$0]  %s1, 8192, %s30, [#allocation8], 512, 512, 32
    $region9: #{tpu_custom_call.1} parent=1 // pred_fallthru
      _
    // Predicated region
    $region10: #{tpu_custom_call.1} parent=1 // pred_check
      _
    $region11: #{tpu_custom_call.1} parent=1 // pred_check_branch
      %37 = sbr.rel (0) target = $region13
    $region12: #{tpu_custom_call.1} parent=1 // pred_region
      %s39 = ssub.s32 2048, 2048
      %40 = vsyncadd [#allocation8], %s39
      %s41 = sshll.u32 [#allocation9], 4
      %s42 = int_to_ptr.vmem [resolvable:$true] %s41
      %47 = dma.hbm_to_vmem [thread:$0]  %s2, 2048, %s42, [#allocation8], 128, 128, 8
    $region13: #{tpu_custom_call.1} parent=1 // pred_fallthru
      _
    // Predicated region
    $region14: #{tpu_custom_call.1} parent=1 // pred_check
      _
    $region15: #{tpu_custom_call.1} parent=1 // pred_check_branch
      %49 = sbr.rel (0) target = $region17
    $region16: #{tpu_custom_call.1} parent=1 // pred_region
      _
    $region17: #{tpu_custom_call.1} parent=1 // pred_fallthru
      _
    // Predicated region
    $region18: #{tpu_custom_call.1} parent=1 // pred_check
      _
    $region19: #{tpu_custom_call.1} parent=1 // pred_check_branch
      %51 = sbr.rel (0) target = $region21
    $region20: #{tpu_custom_call.1} parent=1 // pred_region
      %52 = dma.done [#allocation5], 4096
    $region21: #{tpu_custom_call.1} parent=1 // pred_fallthru
      _
    // Predicated region
    $region22: #{tpu_custom_call.1} parent=1 // pred_check
      _
    $region23: #{tpu_custom_call.1} parent=1 // pred_check_branch
      %54 = sbr.rel (0) target = $region25
    $region24: #{tpu_custom_call.1} parent=1 // pred_region
      %55 = dma.done [#allocation8], 8192
    $region25: #{tpu_custom_call.1} parent=1 // pred_fallthru
      _
    // Predicated region
    $region26: #{tpu_custom_call.1} parent=1 // pred_check
      _
    $region27: #{tpu_custom_call.1} parent=1 // pred_check_branch
      %57 = sbr.rel (0) target = $region29
    $region28: #{tpu_custom_call.1} parent=1 // pred_region
      %58 = dma.done [#allocation8], 2048
    $region29: #{tpu_custom_call.1} parent=1 // pred_fallthru
      _
    %p59 = scmp.eq.s32.totalorder 0, 0
    // Predicated region
    $region30: #{tpu_custom_call.1} parent=1 // pred_check
      %p60 = pneg %p59
    $region31: #{tpu_custom_call.1} parent=1 // pred_check_branch
      %62 = sbr.rel (%p60) target = $region33
    $region32: #{tpu_custom_call.1} parent=1 // pred_region
      %63 = vst [vmem:[#allocation2] sm:$0xff] 0.0
      %64 = vst [vmem:[#allocation3] sm:$0xff] 0.0
    $region33: #{tpu_custom_call.1} parent=1 // pred_fallthru
      _
    %v65 = vld [vmem:[#allocation7] sm:$0xff]
    %v66 = vld [vmem:[#allocation7 + $0x8] sm:$0xff]
    %v67 = vld [vmem:[#allocation7 + $0x10] sm:$0xff]
    %v68 = vld [vmem:[#allocation7 + $0x18] sm:$0xff]
    %v69 = vld [vmem:[#allocation7 + $0x20] sm:$0xff]
    %v70 = vld [vmem:[#allocation7 + $0x28] sm:$0xff]
    %v71 = vld [vmem:[#allocation7 + $0x30] sm:$0xff]
    %v72 = vld [vmem:[#allocation7 + $0x38] sm:$0xff]
    %v73 = vld [vmem:[#allocation7 + $0x40] sm:$0xff]
    %v74 = vld [vmem:[#allocation7 + $0x48] sm:$0xff]
    %v75 = vld [vmem:[#allocation7 + $0x50] sm:$0xff]
    %v76 = vld [vmem:[#allocation7 + $0x58] sm:$0xff]
    %v77 = vld [vmem:[#allocation7 + $0x60] sm:$0xff]
    %v78 = vld [vmem:[#allocation7 + $0x68] sm:$0xff]
    %v79 = vld [vmem:[#allocation7 + $0x70] sm:$0xff]
    %v80 = vld [vmem:[#allocation7 + $0x78] sm:$0xff]
    %v81 = vld [vmem:[#allocation7 + $0x80] sm:$0xff]
    %v82 = vld [vmem:[#allocation7 + $0x88] sm:$0xff]
    %v83 = vld [vmem:[#allocation7 + $0x90] sm:$0xff]
    %v84 = vld [vmem:[#allocation7 + $0x98] sm:$0xff]
    %v85 = vld [vmem:[#allocation7 + $0xa0] sm:$0xff]
    %v86 = vld [vmem:[#allocation7 + $0xa8] sm:$0xff]
    %v87 = vld [vmem:[#allocation7 + $0xb0] sm:$0xff]
    %v88 = vld [vmem:[#allocation7 + $0xb8] sm:$0xff]
    %v89 = vld [vmem:[#allocation7 + $0xc0] sm:$0xff]
    %v90 = vld [vmem:[#allocation7 + $0xc8] sm:$0xff]
    %v91 = vld [vmem:[#allocation7 + $0xd0] sm:$0xff]
    %v92 = vld [vmem:[#allocation7 + $0xd8] sm:$0xff]
    %v93 = vld [vmem:[#allocation7 + $0xe0] sm:$0xff]
    %v94 = vld [vmem:[#allocation7 + $0xe8] sm:$0xff]
    %v95 = vld [vmem:[#allocation7 + $0xf0] sm:$0xff]
    %v96 = vld [vmem:[#allocation7 + $0xf8] sm:$0xff]
    %v97 = vld [vmem:[#allocation7 + $0x100] sm:$0xff]
    %v98 = vld [vmem:[#allocation7 + $0x108] sm:$0xff]
    %v99 = vld [vmem:[#allocation7 + $0x110] sm:$0xff]
    %v100 = vld [vmem:[#allocation7 + $0x118] sm:$0xff]
    %v101 = vld [vmem:[#allocation7 + $0x120] sm:$0xff]
    %v102 = vld [vmem:[#allocation7 + $0x128] sm:$0xff]
    %v103 = vld [vmem:[#allocation7 + $0x130] sm:$0xff]
    %v104 = vld [vmem:[#allocation7 + $0x138] sm:$0xff]
    %v105 = vld [vmem:[#allocation7 + $0x140] sm:$0xff]
    %v106 = vld [vmem:[#allocation7 + $0x148] sm:$0xff]
    %v107 = vld [vmem:[#allocation7 + $0x150] sm:$0xff]
    %v108 = vld [vmem:[#allocation7 + $0x158] sm:$0xff]
    %v109 = vld [vmem:[#allocation7 + $0x160] sm:$0xff]
    %v110 = vld [vmem:[#allocation7 + $0x168] sm:$0xff]
    %v111 = vld [vmem:[#allocation7 + $0x170] sm:$0xff]
    %v112 = vld [vmem:[#allocation7 + $0x178] sm:$0xff]
    %v113 = vld [vmem:[#allocation7 + $0x180] sm:$0xff]
    %v114 = vld [vmem:[#allocation7 + $0x188] sm:$0xff]
    %v115 = vld [vmem:[#allocation7 + $0x190] sm:$0xff]
    %v116 = vld [vmem:[#allocation7 + $0x198] sm:$0xff]
    %v117 = vld [vmem:[#allocation7 + $0x1a0] sm:$0xff]
    %v118 = vld [vmem:[#allocation7 + $0x1a8] sm:$0xff]
    %v119 = vld [vmem:[#allocation7 + $0x1b0] sm:$0xff]
    %v120 = vld [vmem:[#allocation7 + $0x1b8] sm:$0xff]
    %v121 = vld [vmem:[#allocation7 + $0x1c0] sm:$0xff]
    %v122 = vld [vmem:[#allocation7 + $0x1c8] sm:$0xff]
    %v123 = vld [vmem:[#allocation7 + $0x1d0] sm:$0xff]
    %v124 = vld [vmem:[#allocation7 + $0x1d8] sm:$0xff]
    %v125 = vld [vmem:[#allocation7 + $0x1e0] sm:$0xff]
    %v126 = vld [vmem:[#allocation7 + $0x1e8] sm:$0xff]
    %v127 = vld [vmem:[#allocation7 + $0x1f0] sm:$0xff]
    %v128 = vld [vmem:[#allocation7 + $0x1f8] sm:$0xff]
    %v129 = vld [vmem:[#allocation2] sm:$0xff]
    %v130 = vld [vmem:[#allocation3] sm:$0xff]
    %v131 = vld [vmem:[#allocation4] sm:$0xff]
    %v132 = vld [vmem:[#allocation4 + $0x8] sm:$0xff]
    %v133 = vld [vmem:[#allocation4 + $0x10] sm:$0xff]
    %v134 = vld [vmem:[#allocation4 + $0x18] sm:$0xff]
    %135 = vmatprep.subr.mxu0 %v66
    %136 = vmatpush1.msra.mxu0 %v65
    %137 = vmatprep.subr.mxu0 %v70
    %138 = vmatpush1.msra.mxu0 %v69
    %139 = vmatprep.subr.mxu0 %v74
    %140 = vmatpush1.msra.mxu0 %v73
    %141 = vmatprep.subr.mxu0 %v78
    %142 = vmatpush1.msra.mxu0 %v77
    %143 = vmatprep.subr.mxu0 %v82
    %144 = vmatpush1.msra.mxu0 %v81
    %145 = vmatprep.subr.mxu0 %v86
    %146 = vmatpush1.msra.mxu0 %v85
    %147 = vmatprep.subr.mxu0 %v90
    %148 = vmatpush1.msra.mxu0 %v89
    %149 = vmatprep.subr.mxu0 %v94
    %150 = vmatpush1.msra.mxu0 %v93
    %151 = vmatprep.subr.mxu0 %v98
    %152 = vmatpush1.msra.mxu0 %v97
    %153 = vmatprep.subr.mxu0 %v102
    %154 = vmatpush1.msra.mxu0 %v101
    %155 = vmatprep.subr.mxu0 %v106
    %156 = vmatpush1.msra.mxu0 %v105
    %157 = vmatprep.subr.mxu0 %v110
    %158 = vmatpush1.msra.mxu0 %v109
    %159 = vmatprep.subr.mxu0 %v114
    %160 = vmatpush1.msra.mxu0 %v113
    %161 = vmatprep.subr.mxu0 %v118
    %162 = vmatpush1.msra.mxu0 %v117
    %163 = vmatprep.subr.mxu0 %v122
    %164 = vmatpush1.msra.mxu0 %v121
    %165 = vmatprep.subr.mxu0 %v126
    %166 = vmatpush1.msra.mxu0 %v125
    %167 = vmatprep.subr.mxu0 0.0
    %168 = vmatpush1.msra.mxu0 0.0
    %169 = vmatprep.subr.mxu0 0.0
    %170 = vmatpush1.msra.mxu0 0.0
    %171 = vmatprep.subr.mxu0 0.0
    %172 = vmatpush1.msra.mxu0 0.0
    %173 = vmatprep.subr.mxu0 0.0
    %174 = vmatpush1.msra.mxu0 0.0
    %175 = vmatprep.subr.mxu0 0.0
    %176 = vmatpush1.msra.mxu0 0.0
    %177 = vmatprep.subr.mxu0 0.0
    %178 = vmatpush1.msra.mxu0 0.0
    %179 = vmatprep.subr.mxu0 0.0
    %180 = vmatpush1.msra.mxu0 0.0
    %181 = vmatprep.subr.mxu0 0.0
    %182 = vmatpush1.msra.mxu0 0.0
    %183 = vmatprep.subr.mxu0 0.0
    %184 = vmatpush1.msra.mxu0 0.0
    %185 = vmatprep.subr.mxu0 0.0
    %186 = vmatpush1.msra.mxu0 0.0
    %187 = vmatprep.subr.mxu0 0.0
    %188 = vmatpush1.msra.mxu0 0.0
    %189 = vmatprep.subr.mxu0 0.0
    %190 = vmatpush1.msra.mxu0 0.0
    %191 = vmatprep.subr.mxu0 0.0
    %192 = vmatpush1.msra.mxu0 0.0
    %193 = vmatprep.subr.mxu0 0.0
    %194 = vmatpush1.msra.mxu0 0.0
    %195 = vmatprep.subr.mxu0 0.0
    %196 = vmatpush1.msra.mxu0 0.0
    %197 = vmatprep.subr.mxu0 0.0
    %198 = vmatpush1.msra.mxu0 0.0
    %199 = vmatprep.mubr.f32.mxu0 0.0
    %200 = vmatmul.mubr.f32.gmra.mrb[0].mxu0 %v129
    %v201 = vpop.f32.mrb[0].mxu0
    %v202 = vadd.f32 0.0, %v201
    %v203 = vpop.f32.mrb[0].mxu0
    %v204 = vadd.f32 0.0, %v203
    %205 = vdwg.mxu0
    %206 = vmatprep.subr.mxu0 %v68
    %207 = vmatpush1.msra.mxu0 %v67
    %208 = vmatprep.subr.mxu0 %v72
    %209 = vmatpush1.msra.mxu0 %v71
    %210 = vmatprep.subr.mxu0 %v76
    %211 = vmatpush1.msra.mxu0 %v75
    %212 = vmatprep.subr.mxu0 %v80
    %213 = vmatpush1.msra.mxu0 %v79
    %214 = vmatprep.subr.mxu0 %v84
    %215 = vmatpush1.msra.mxu0 %v83
    %216 = vmatprep.subr.mxu0 %v88
    %217 = vmatpush1.msra.mxu0 %v87
    %218 = vmatprep.subr.mxu0 %v92
    %219 = vmatpush1.msra.mxu0 %v91
    %220 = vmatprep.subr.mxu0 %v96
    %221 = vmatpush1.msra.mxu0 %v95
    %222 = vmatprep.subr.mxu0 %v100
    %223 = vmatpush1.msra.mxu0 %v99
    %224 = vmatprep.subr.mxu0 %v104
    %225 = vmatpush1.msra.mxu0 %v103
    %226 = vmatprep.subr.mxu0 %v108
    %227 = vmatpush1.msra.mxu0 %v107
    %228 = vmatprep.subr.mxu0 %v112
    %229 = vmatpush1.msra.mxu0 %v111
    %230 = vmatprep.subr.mxu0 %v116
    %231 = vmatpush1.msra.mxu0 %v115
    %232 = vmatprep.subr.mxu0 %v120
    %233 = vmatpush1.msra.mxu0 %v119
    %234 = vmatprep.subr.mxu0 %v124
    %235 = vmatpush1.msra.mxu0 %v123
    %236 = vmatprep.subr.mxu0 %v128
    %237 = vmatpush1.msra.mxu0 %v127
    %238 = vmatprep.subr.mxu0 0.0
    %239 = vmatpush1.msra.mxu0 0.0
    %240 = vmatprep.subr.mxu0 0.0
    %241 = vmatpush1.msra.mxu0 0.0
    %242 = vmatprep.subr.mxu0 0.0
    %243 = vmatpush1.msra.mxu0 0.0
    %244 = vmatprep.subr.mxu0 0.0
    %245 = vmatpush1.msra.mxu0 0.0
    %246 = vmatprep.subr.mxu0 0.0
    %247 = vmatpush1.msra.mxu0 0.0
    %248 = vmatprep.subr.mxu0 0.0
    %249 = vmatpush1.msra.mxu0 0.0
    %250 = vmatprep.subr.mxu0 0.0
    %251 = vmatpush1.msra.mxu0 0.0
    %252 = vmatprep.subr.mxu0 0.0
    %253 = vmatpush1.msra.mxu0 0.0
    %254 = vmatprep.subr.mxu0 0.0
    %255 = vmatpush1.msra.mxu0 0.0
    %256 = vmatprep.subr.mxu0 0.0
    %257 = vmatpush1.msra.mxu0 0.0
    %258 = vmatprep.subr.mxu0 0.0
    %259 = vmatpush1.msra.mxu0 0.0
    %260 = vmatprep.subr.mxu0 0.0
    %261 = vmatpush1.msra.mxu0 0.0
    %262 = vmatprep.subr.mxu0 0.0
    %263 = vmatpush1.msra.mxu0 0.0
    %264 = vmatprep.subr.mxu0 0.0
    %265 = vmatpush1.msra.mxu0 0.0
    %266 = vmatprep.subr.mxu0 0.0
    %267 = vmatpush1.msra.mxu0 0.0
    %268 = vmatprep.subr.mxu0 0.0
    %269 = vmatpush1.msra.mxu0 0.0
    %270 = vmatprep.mubr.f32.mxu0 0.0
    %271 = vmatmul.mubr.f32.gmra.mrb[0].mxu0 %v129
    %v272 = vpop.f32.mrb[0].mxu0
    %v273 = vadd.f32 0.0, %v272
    %v274 = vpop.f32.mrb[0].mxu0
    %v275 = vadd.f32 0.0, %v274
    %276 = vdwg.mxu0
    %v277 = vadd.f32 %v131, %v202
    %v278 = vadd.f32 %v132, %v204
    %v279 = vadd.f32 %v133, %v273
    %v280 = vadd.f32 %v134, %v275
    %v281 = vxor.u32 %v277, 2147483648
    %v282 = vxor.u32 %v278, 2147483648
    %v283 = vmul.f32 %v281, 1.442695
    %v284 = vpow.pop %v283
    %v285 = vmul.f32 %v282, 1.442695
    %v286 = vpow.pop %v285
    %v287 = vadd.f32 %v284, 1.0
    %v288 = vadd.f32 %v286, 1.0
    %v289 = vrcp.pop %v287
    %v290 = vmul.f32 1.0, %v289
    %v291 = vrcp.pop %v288
    %v292 = vmul.f32 1.0, %v291
    %v293 = vxor.u32 %v280, 2147483648
    %v294 = vmul.f32 %v293, 1.442695
    %v295 = vpow.pop %v294
    %v296 = vadd.f32 %v295, 1.0
    %v297 = vrcp.pop %v296
    %v298 = vmul.f32 1.0, %v297
    %v299 = vtanh.pop %v279
    %v300 = vmul.f32 %v292, %v130
    %v301 = vmul.f32 %v290, %v299
    %v302 = vadd.f32 %v300, %v301
    %v303 = vtanh.pop %v302
    %v304 = vmul.f32 %v298, %v303
    %s305 = scalar_lea.vmem [#allocation4], 32
    %v306 = vld [vmem:[%s305] sm:$0xff]
    %v307 = vld [vmem:[%s305 + $0x8] sm:$0xff]
    %v308 = vld [vmem:[%s305 + $0x10] sm:$0xff]
    %v309 = vld [vmem:[%s305 + $0x18] sm:$0xff]
    %310 = vmatprep.subr.mxu0 %v66
    %311 = vmatpush1.msra.mxu0 %v65
    %312 = vmatprep.subr.mxu0 %v70
    %313 = vmatpush1.msra.mxu0 %v69
    %314 = vmatprep.subr.mxu0 %v74
    %315 = vmatpush1.msra.mxu0 %v73
    %316 = vmatprep.subr.mxu0 %v78
    %317 = vmatpush1.msra.mxu0 %v77
    %318 = vmatprep.subr.mxu0 %v82
    %319 = vmatpush1.msra.mxu0 %v81
    %320 = vmatprep.subr.mxu0 %v86
    %321 = vmatpush1.msra.mxu0 %v85
    %322 = vmatprep.subr.mxu0 %v90
    %323 = vmatpush1.msra.mxu0 %v89
    %324 = vmatprep.subr.mxu0 %v94
    %325 = vmatpush1.msra.mxu0 %v93
    %326 = vmatprep.subr.mxu0 %v98
    %327 = vmatpush1.msra.mxu0 %v97
    %328 = vmatprep.subr.mxu0 %v102
    %329 = vmatpush1.msra.mxu0 %v101
    %330 = vmatprep.subr.mxu0 %v106
    %331 = vmatpush1.msra.mxu0 %v105
    %332 = vmatprep.subr.mxu0 %v110
    %333 = vmatpush1.msra.mxu0 %v109
    %334 = vmatprep.subr.mxu0 %v114
    %335 = vmatpush1.msra.mxu0 %v113
    %336 = vmatprep.subr.mxu0 %v118
    %337 = vmatpush1.msra.mxu0 %v117
    %338 = vmatprep.subr.mxu0 %v122
    %339 = vmatpush1.msra.mxu0 %v121
    %340 = vmatprep.subr.mxu0 %v126
    %341 = vmatpush1.msra.mxu0 %v125
    %342 = vmatprep.subr.mxu0 0.0
    %343 = vmatpush1.msra.mxu0 0.0
    %344 = vmatprep.subr.mxu0 0.0
    %345 = vmatpush1.msra.mxu0 0.0
    %346 = vmatprep.subr.mxu0 0.0
    %347 = vmatpush1.msra.mxu0 0.0
    %348 = vmatprep.subr.mxu0 0.0
    %349 = vmatpush1.msra.mxu0 0.0
    %350 = vmatprep.subr.mxu0 0.0
    %351 = vmatpush1.msra.mxu0 0.0
    %352 = vmatprep.subr.mxu0 0.0
    %353 = vmatpush1.msra.mxu0 0.0
    %354 = vmatprep.subr.mxu0 0.0
    %355 = vmatpush1.msra.mxu0 0.0
    %356 = vmatprep.subr.mxu0 0.0
    %357 = vmatpush1.msra.mxu0 0.0
    %358 = vmatprep.subr.mxu0 0.0
    %359 = vmatpush1.msra.mxu0 0.0
    %360 = vmatprep.subr.mxu0 0.0
    %361 = vmatpush1.msra.mxu0 0.0
    %362 = vmatprep.subr.mxu0 0.0
    %363 = vmatpush1.msra.mxu0 0.0
    %364 = vmatprep.subr.mxu0 0.0
    %365 = vmatpush1.msra.mxu0 0.0
    %366 = vmatprep.subr.mxu0 0.0
    %367 = vmatpush1.msra.mxu0 0.0
    %368 = vmatprep.subr.mxu0 0.0
    %369 = vmatpush1.msra.mxu0 0.0
    %370 = vmatprep.subr.mxu0 0.0
    %371 = vmatpush1.msra.mxu0 0.0
    %372 = vmatprep.subr.mxu0 0.0
    %373 = vmatpush1.msra.mxu0 0.0
    %374 = vmatprep.mubr.f32.mxu0 0.0
    %375 = vmatmul.mubr.f32.gmra.mrb[0].mxu0 %v304
    %v376 = vpop.f32.mrb[0].mxu0
    %v377 = vadd.f32 0.0, %v376
    %v378 = vpop.f32.mrb[0].mxu0
    %v379 = vadd.f32 0.0, %v378
    %380 = vdwg.mxu0
    %381 = vmatprep.subr.mxu0 %v68
    %382 = vmatpush1.msra.mxu0 %v67
    %383 = vmatprep.subr.mxu0 %v72
    %384 = vmatpush1.msra.mxu0 %v71
    %385 = vmatprep.subr.mxu0 %v76
    %386 = vmatpush1.msra.mxu0 %v75
    %387 = vmatprep.subr.mxu0 %v80
    %388 = vmatpush1.msra.mxu0 %v79
    %389 = vmatprep.subr.mxu0 %v84
    %390 = vmatpush1.msra.mxu0 %v83
    %391 = vmatprep.subr.mxu0 %v88
    %392 = vmatpush1.msra.mxu0 %v87
    %393 = vmatprep.subr.mxu0 %v92
    %394 = vmatpush1.msra.mxu0 %v91
    %395 = vmatprep.subr.mxu0 %v96
    %396 = vmatpush1.msra.mxu0 %v95
    %397 = vmatprep.subr.mxu0 %v100
    %398 = vmatpush1.msra.mxu0 %v99
    %399 = vmatprep.subr.mxu0 %v104
    %400 = vmatpush1.msra.mxu0 %v103
    %401 = vmatprep.subr.mxu0 %v108
    %402 = vmatpush1.msra.mxu0 %v107
    %403 = vmatprep.subr.mxu0 %v112
    %404 = vmatpush1.msra.mxu0 %v111
    %405 = vmatprep.subr.mxu0 %v116
    %406 = vmatpush1.msra.mxu0 %v115
    %407 = vmatprep.subr.mxu0 %v120
    %408 = vmatpush1.msra.mxu0 %v119
    %409 = vmatprep.subr.mxu0 %v124
    %410 = vmatpush1.msra.mxu0 %v123
    %411 = vmatprep.subr.mxu0 %v128
    %412 = vmatpush1.msra.mxu0 %v127
    %413 = vmatprep.subr.mxu0 0.0
    %414 = vmatpush1.msra.mxu0 0.0
    %415 = vmatprep.subr.mxu0 0.0
    %416 = vmatpush1.msra.mxu0 0.0
    %417 = vmatprep.subr.mxu0 0.0
    %418 = vmatpush1.msra.mxu0 0.0
    %419 = vmatprep.subr.mxu0 0.0
    %420 = vmatpush1.msra.mxu0 0.0
    %421 = vmatprep.subr.mxu0 0.0
    %422 = vmatpush1.msra.mxu0 0.0
    %423 = vmatprep.subr.mxu0 0.0
    %424 = vmatpush1.msra.mxu0 0.0
    %425 = vmatprep.subr.mxu0 0.0
    %426 = vmatpush1.msra.mxu0 0.0
    %427 = vmatprep.subr.mxu0 0.0
    %428 = vmatpush1.msra.mxu0 0.0
    %429 = vmatprep.subr.mxu0 0.0
    %430 = vmatpush1.msra.mxu0 0.0
    %431 = vmatprep.subr.mxu0 0.0
    %432 = vmatpush1.msra.mxu0 0.0
    %433 = vmatprep.subr.mxu0 0.0
    %434 = vmatpush1.msra.mxu0 0.0
    %435 = vmatprep.subr.mxu0 0.0
    %436 = vmatpush1.msra.mxu0 0.0
    %437 = vmatprep.subr.mxu0 0.0
    %438 = vmatpush1.msra.mxu0 0.0
    %439 = vmatprep.subr.mxu0 0.0
    %440 = vmatpush1.msra.mxu0 0.0
    %441 = vmatprep.subr.mxu0 0.0
    %442 = vmatpush1.msra.mxu0 0.0
    %443 = vmatprep.subr.mxu0 0.0
    %444 = vmatpush1.msra.mxu0 0.0
    %445 = vmatprep.mubr.f32.mxu0 0.0
    %446 = vmatmul.mubr.f32.gmra.mrb[0].mxu0 %v304
    %v447 = vpop.f32.mrb[0].mxu0
    %v448 = vadd.f32 0.0, %v447
    %v449 = vpop.f32.mrb[0].mxu0
    %v450 = vadd.f32 0.0, %v449
    %451 = vdwg.mxu0
    %v452 = vadd.f32 %v306, %v377
    %v453 = vadd.f32 %v307, %v379
    %v454 = vadd.f32 %v308, %v448
    %v455 = vadd.f32 %v309, %v450
    %v456 = vxor.u32 %v452, 2147483648
    %v457 = vxor.u32 %v453, 2147483648
    %v458 = vmul.f32 %v456, 1.442695
    %v459 = vpow.pop %v458
    %v460 = vmul.f32 %v457, 1.442695
    %v461 = vpow.pop %v460
    %v462 = vadd.f32 %v459, 1.0
    %v463 = vadd.f32 %v461, 1.0
    %v464 = vrcp.pop %v462
    %v465 = vmul.f32 1.0, %v464
    %v466 = vrcp.pop %v463
    %v467 = vmul.f32 1.0, %v466
    %v468 = vxor.u32 %v455, 2147483648
    %v469 = vmul.f32 %v468, 1.442695
    %v470 = vpow.pop %v469
    %v471 = vadd.f32 %v470, 1.0
    %v472 = vrcp.pop %v471
    %v473 = vmul.f32 1.0, %v472
    %v474 = vtanh.pop %v454
    %v475 = vmul.f32 %v467, %v302
    %v476 = vmul.f32 %v465, %v474
    %v477 = vadd.f32 %v475, %v476
    %v478 = vtanh.pop %v477
    %v479 = vmul.f32 %v473, %v478
    %s480 = scalar_lea.vmem [#allocation4], 64
    %v481 = vld [vmem:[%s480] sm:$0xff]
    %v482 = vld [vmem:[%s480 + $0x8] sm:$0xff]
    %v483 = vld [vmem:[%s480 + $0x10] sm:$0xff]
    %v484 = vld [vmem:[%s480 + $0x18] sm:$0xff]
    %485 = vmatprep.subr.mxu0 %v66
    %486 = vmatpush1.msra.mxu0 %v65
    %487 = vmatprep.subr.mxu0 %v70
    %488 = vmatpush1.msra.mxu0 %v69
    %489 = vmatprep.subr.mxu0 %v74
    %490 = vmatpush1.msra.mxu0 %v73
    %491 = vmatprep.subr.mxu0 %v78
    %492 = vmatpush1.msra.mxu0 %v77
    %493 = vmatprep.subr.mxu0 %v82
    %494 = vmatpush1.msra.mxu0 %v81
    %495 = vmatprep.subr.mxu0 %v86
    %496 = vmatpush1.msra.mxu0 %v85
    %497 = vmatprep.subr.mxu0 %v90
    %498 = vmatpush1.msra.mxu0 %v89
    %499 = vmatprep.subr.mxu0 %v94
    %500 = vmatpush1.msra.mxu0 %v93
    %501 = vmatprep.subr.mxu0 %v98
    %502 = vmatpush1.msra.mxu0 %v97
    %503 = vmatprep.subr.mxu0 %v102
    %504 = vmatpush1.msra.mxu0 %v101
    %505 = vmatprep.subr.mxu0 %v106
    %506 = vmatpush1.msra.mxu0 %v105
    %507 = vmatprep.subr.mxu0 %v110
    %508 = vmatpush1.msra.mxu0 %v109
    %509 = vmatprep.subr.mxu0 %v114
    %510 = vmatpush1.msra.mxu0 %v113
    %511 = vmatprep.subr.mxu0 %v118
    %512 = vmatpush1.msra.mxu0 %v117
    %513 = vmatprep.subr.mxu0 %v122
    %514 = vmatpush1.msra.mxu0 %v121
    %515 = vmatprep.subr.mxu0 %v126
    %516 = vmatpush1.msra.mxu0 %v125
    %517 = vmatprep.subr.mxu0 0.0
    %518 = vmatpush1.msra.mxu0 0.0
    %519 = vmatprep.subr.mxu0 0.0
    %520 = vmatpush1.msra.mxu0 0.0
    %521 = vmatprep.subr.mxu0 0.0
    %522 = vmatpush1.msra.mxu0 0.0
    %523 = vmatprep.subr.mxu0 0.0
    %524 = vmatpush1.msra.mxu0 0.0
    %525 = vmatprep.subr.mxu0 0.0
    %526 = vmatpush1.msra.mxu0 0.0
    %527 = vmatprep.subr.mxu0 0.0
    %528 = vmatpush1.msra.mxu0 0.0
    %529 = vmatprep.subr.mxu0 0.0
    %530 = vmatpush1.msra.mxu0 0.0
    %531 = vmatprep.subr.mxu0 0.0
    %532 = vmatpush1.msra.mxu0 0.0
    %533 = vmatprep.subr.mxu0 0.0
    %534 = vmatpush1.msra.mxu0 0.0
    %535 = vmatprep.subr.mxu0 0.0
    %536 = vmatpush1.msra.mxu0 0.0
    %537 = vmatprep.subr.mxu0 0.0
    %538 = vmatpush1.msra.mxu0 0.0
    %539 = vmatprep.subr.mxu0 0.0
    %540 = vmatpush1.msra.mxu0 0.0
    %541 = vmatprep.subr.mxu0 0.0
    %542 = vmatpush1.msra.mxu0 0.0
    %543 = vmatprep.subr.mxu0 0.0
    %544 = vmatpush1.msra.mxu0 0.0
    %545 = vmatprep.subr.mxu0 0.0
    %546 = vmatpush1.msra.mxu0 0.0
    %547 = vmatprep.subr.mxu0 0.0
    %548 = vmatpush1.msra.mxu0 0.0
    %549 = vmatprep.mubr.f32.mxu0 0.0
    %550 = vmatmul.mubr.f32.gmra.mrb[0].mxu0 %v479
    %v551 = vpop.f32.mrb[0].mxu0
    %v552 = vadd.f32 0.0, %v551
    %v553 = vpop.f32.mrb[0].mxu0
    %v554 = vadd.f32 0.0, %v553
    %555 = vdwg.mxu0
    %556 = vmatprep.subr.mxu0 %v68
    %557 = vmatpush1.msra.mxu0 %v67
    %558 = vmatprep.subr.mxu0 %v72
    %559 = vmatpush1.msra.mxu0 %v71
    %560 = vmatprep.subr.mxu0 %v76
    %561 = vmatpush1.msra.mxu0 %v75
    %562 = vmatprep.subr.mxu0 %v80
    %563 = vmatpush1.msra.mxu0 %v79
    %564 = vmatprep.subr.mxu0 %v84
    %565 = vmatpush1.msra.mxu0 %v83
    %566 = vmatprep.subr.mxu0 %v88
    %567 = vmatpush1.msra.mxu0 %v87
    %568 = vmatprep.subr.mxu0 %v92
    %569 = vmatpush1.msra.mxu0 %v91
    %570 = vmatprep.subr.mxu0 %v96
    %571 = vmatpush1.msra.mxu0 %v95
    %572 = vmatprep.subr.mxu0 %v100
    %573 = vmatpush1.msra.mxu0 %v99
    %574 = vmatprep.subr.mxu0 %v104
    %575 = vmatpush1.msra.mxu0 %v103
    %576 = vmatprep.subr.mxu0 %v108
    %577 = vmatpush1.msra.mxu0 %v107
    %578 = vmatprep.subr.mxu0 %v112
    %579 = vmatpush1.msra.mxu0 %v111
    %580 = vmatprep.subr.mxu0 %v116
    %581 = vmatpush1.msra.mxu0 %v115
    %582 = vmatprep.subr.mxu0 %v120
    %583 = vmatpush1.msra.mxu0 %v119
    %584 = vmatprep.subr.mxu0 %v124
    %585 = vmatpush1.msra.mxu0 %v123
    %586 = vmatprep.subr.mxu0 %v128
    %587 = vmatpush1.msra.mxu0 %v127
    %588 = vmatprep.subr.mxu0 0.0
    %589 = vmatpush1.msra.mxu0 0.0
    %590 = vmatprep.subr.mxu0 0.0
    %591 = vmatpush1.msra.mxu0 0.0
    %592 = vmatprep.subr.mxu0 0.0
    %593 = vmatpush1.msra.mxu0 0.0
    %594 = vmatprep.subr.mxu0 0.0
    %595 = vmatpush1.msra.mxu0 0.0
    %596 = vmatprep.subr.mxu0 0.0
    %597 = vmatpush1.msra.mxu0 0.0
    %598 = vmatprep.subr.mxu0 0.0
    %599 = vmatpush1.msra.mxu0 0.0
    %600 = vmatprep.subr.mxu0 0.0
    %601 = vmatpush1.msra.mxu0 0.0
    %602 = vmatprep.subr.mxu0 0.0
    %603 = vmatpush1.msra.mxu0 0.0
    %604 = vmatprep.subr.mxu0 0.0
    %605 = vmatpush1.msra.mxu0 0.0
    %606 = vmatprep.subr.mxu0 0.0
    %607 = vmatpush1.msra.mxu0 0.0
    %608 = vmatprep.subr.mxu0 0.0
    %609 = vmatpush1.msra.mxu0 0.0
    %610 = vmatprep.subr.mxu0 0.0
    %611 = vmatpush1.msra.mxu0 0.0
    %612 = vmatprep.subr.mxu0 0.0
    %613 = vmatpush1.msra.mxu0 0.0
    %614 = vmatprep.subr.mxu0 0.0
    %615 = vmatpush1.msra.mxu0 0.0
    %616 = vmatprep.subr.mxu0 0.0
    %617 = vmatpush1.msra.mxu0 0.0
    %618 = vmatprep.subr.mxu0 0.0
    %619 = vmatpush1.msra.mxu0 0.0
    %620 = vmatprep.mubr.f32.mxu0 0.0
    %621 = vmatmul.mubr.f32.gmra.mrb[0].mxu0 %v479
    %v622 = vpop.f32.mrb[0].mxu0
    %v623 = vadd.f32 0.0, %v622
    %v624 = vpop.f32.mrb[0].mxu0
    %v625 = vadd.f32 0.0, %v624
    %626 = vdwg.mxu0
    %v627 = vadd.f32 %v481, %v552
    %v628 = vadd.f32 %v482, %v554
    %v629 = vadd.f32 %v483, %v623
    %v630 = vadd.f32 %v484, %v625
    %v631 = vxor.u32 %v627, 2147483648
    %v632 = vxor.u32 %v628, 2147483648
    %v633 = vmul.f32 %v631, 1.442695
    %v634 = vpow.pop %v633
    %v635 = vmul.f32 %v632, 1.442695
    %v636 = vpow.pop %v635
    %v637 = vadd.f32 %v634, 1.0
    %v638 = vadd.f32 %v636, 1.0
    %v639 = vrcp.pop %v637
    %v640 = vmul.f32 1.0, %v639
    %v641 = vrcp.pop %v638
    %v642 = vmul.f32 1.0, %v641
    %v643 = vxor.u32 %v630, 2147483648
    %v644 = vmul.f32 %v643, 1.442695
    %v645 = vpow.pop %v644
    %v646 = vadd.f32 %v645, 1.0
    %v647 = vrcp.pop %v646
    %v648 = vmul.f32 1.0, %v647
    %v649 = vtanh.pop %v629
    %v650 = vmul.f32 %v642, %v477
    %v651 = vmul.f32 %v640, %v649
    %v652 = vadd.f32 %v650, %v651
    %v653 = vtanh.pop %v652
    %v654 = vmul.f32 %v648, %v653
    %s655 = scalar_lea.vmem [#allocation4], 96
    %v656 = vld [vmem:[%s655] sm:$0xff]
    %v657 = vld [vmem:[%s655 + $0x8] sm:$0xff]
    %v658 = vld [vmem:[%s655 + $0x10] sm:$0xff]
    %v659 = vld [vmem:[%s655 + $0x18] sm:$0xff]
    %660 = vmatprep.subr.mxu0 %v66
    %661 = vmatpush1.msra.mxu0 %v65
    %662 = vmatprep.subr.mxu0 %v70
    %663 = vmatpush1.msra.mxu0 %v69
    %664 = vmatprep.subr.mxu0 %v74
    %665 = vmatpush1.msra.mxu0 %v73
    %666 = vmatprep.subr.mxu0 %v78
    %667 = vmatpush1.msra.mxu0 %v77
    %668 = vmatprep.subr.mxu0 %v82
    %669 = vmatpush1.msra.mxu0 %v81
    %670 = vmatprep.subr.mxu0 %v86
    %671 = vmatpush1.msra.mxu0 %v85
    %672 = vmatprep.subr.mxu0 %v90
    %673 = vmatpush1.msra.mxu0 %v89
    %674 = vmatprep.subr.mxu0 %v94
    %675 = vmatpush1.msra.mxu0 %v93
    %676 = vmatprep.subr.mxu0 %v98
    %677 = vmatpush1.msra.mxu0 %v97
    %678 = vmatprep.subr.mxu0 %v102
    %679 = vmatpush1.msra.mxu0 %v101
    %680 = vmatprep.subr.mxu0 %v106
    %681 = vmatpush1.msra.mxu0 %v105
    %682 = vmatprep.subr.mxu0 %v110
    %683 = vmatpush1.msra.mxu0 %v109
    %684 = vmatprep.subr.mxu0 %v114
    %685 = vmatpush1.msra.mxu0 %v113
    %686 = vmatprep.subr.mxu0 %v118
    %687 = vmatpush1.msra.mxu0 %v117
    %688 = vmatprep.subr.mxu0 %v122
    %689 = vmatpush1.msra.mxu0 %v121
    %690 = vmatprep.subr.mxu0 %v126
    %691 = vmatpush1.msra.mxu0 %v125
    %692 = vmatprep.subr.mxu0 0.0
    %693 = vmatpush1.msra.mxu0 0.0
    %694 = vmatprep.subr.mxu0 0.0
    %695 = vmatpush1.msra.mxu0 0.0
    %696 = vmatprep.subr.mxu0 0.0
    %697 = vmatpush1.msra.mxu0 0.0
    %698 = vmatprep.subr.mxu0 0.0
    %699 = vmatpush1.msra.mxu0 0.0
    %700 = vmatprep.subr.mxu0 0.0
    %701 = vmatpush1.msra.mxu0 0.0
    %702 = vmatprep.subr.mxu0 0.0
    %703 = vmatpush1.msra.mxu0 0.0
    %704 = vmatprep.subr.mxu0 0.0
    %705 = vmatpush1.msra.mxu0 0.0
    %706 = vmatprep.subr.mxu0 0.0
    %707 = vmatpush1.msra.mxu0 0.0
    %708 = vmatprep.subr.mxu0 0.0
    %709 = vmatpush1.msra.mxu0 0.0
    %710 = vmatprep.subr.mxu0 0.0
    %711 = vmatpush1.msra.mxu0 0.0
    %712 = vmatprep.subr.mxu0 0.0
    %713 = vmatpush1.msra.mxu0 0.0
    %714 = vmatprep.subr.mxu0 0.0
    %715 = vmatpush1.msra.mxu0 0.0
    %716 = vmatprep.subr.mxu0 0.0
    %717 = vmatpush1.msra.mxu0 0.0
    %718 = vmatprep.subr.mxu0 0.0
    %719 = vmatpush1.msra.mxu0 0.0
    %720 = vmatprep.subr.mxu0 0.0
    %721 = vmatpush1.msra.mxu0 0.0
    %722 = vmatprep.subr.mxu0 0.0
    %723 = vmatpush1.msra.mxu0 0.0
    %724 = vmatprep.mubr.f32.mxu0 0.0
    %725 = vmatmul.mubr.f32.gmra.mrb[0].mxu0 %v654
    %v726 = vpop.f32.mrb[0].mxu0
    %v727 = vadd.f32 0.0, %v726
    %v728 = vpop.f32.mrb[0].mxu0
    %v729 = vadd.f32 0.0, %v728
    %730 = vdwg.mxu0
    %731 = vmatprep.subr.mxu0 %v68
    %732 = vmatpush1.msra.mxu0 %v67
    %733 = vmatprep.subr.mxu0 %v72
    %734 = vmatpush1.msra.mxu0 %v71
    %735 = vmatprep.subr.mxu0 %v76
    %736 = vmatpush1.msra.mxu0 %v75
    %737 = vmatprep.subr.mxu0 %v80
    %738 = vmatpush1.msra.mxu0 %v79
    %739 = vmatprep.subr.mxu0 %v84
    %740 = vmatpush1.msra.mxu0 %v83
    %741 = vmatprep.subr.mxu0 %v88
    %742 = vmatpush1.msra.mxu0 %v87
    %743 = vmatprep.subr.mxu0 %v92
    %744 = vmatpush1.msra.mxu0 %v91
    %745 = vmatprep.subr.mxu0 %v96
    %746 = vmatpush1.msra.mxu0 %v95
    %747 = vmatprep.subr.mxu0 %v100
    %748 = vmatpush1.msra.mxu0 %v99
    %749 = vmatprep.subr.mxu0 %v104
    %750 = vmatpush1.msra.mxu0 %v103
    %751 = vmatprep.subr.mxu0 %v108
    %752 = vmatpush1.msra.mxu0 %v107
    %753 = vmatprep.subr.mxu0 %v112
    %754 = vmatpush1.msra.mxu0 %v111
    %755 = vmatprep.subr.mxu0 %v116
    %756 = vmatpush1.msra.mxu0 %v115
    %757 = vmatprep.subr.mxu0 %v120
    %758 = vmatpush1.msra.mxu0 %v119
    %759 = vmatprep.subr.mxu0 %v124
    %760 = vmatpush1.msra.mxu0 %v123
    %761 = vmatprep.subr.mxu0 %v128
    %762 = vmatpush1.msra.mxu0 %v127
    %763 = vmatprep.subr.mxu0 0.0
    %764 = vmatpush1.msra.mxu0 0.0
    %765 = vmatprep.subr.mxu0 0.0
    %766 = vmatpush1.msra.mxu0 0.0
    %767 = vmatprep.subr.mxu0 0.0
    %768 = vmatpush1.msra.mxu0 0.0
    %769 = vmatprep.subr.mxu0 0.0
    %770 = vmatpush1.msra.mxu0 0.0
    %771 = vmatprep.subr.mxu0 0.0
    %772 = vmatpush1.msra.mxu0 0.0
    %773 = vmatprep.subr.mxu0 0.0
    %774 = vmatpush1.msra.mxu0 0.0
    %775 = vmatprep.subr.mxu0 0.0
    %776 = vmatpush1.msra.mxu0 0.0
    %777 = vmatprep.subr.mxu0 0.0
    %778 = vmatpush1.msra.mxu0 0.0
    %779 = vmatprep.subr.mxu0 0.0
    %780 = vmatpush1.msra.mxu0 0.0
    %781 = vmatprep.subr.mxu0 0.0
    %782 = vmatpush1.msra.mxu0 0.0
    %783 = vmatprep.subr.mxu0 0.0
    %784 = vmatpush1.msra.mxu0 0.0
    %785 = vmatprep.subr.mxu0 0.0
    %786 = vmatpush1.msra.mxu0 0.0
    %787 = vmatprep.subr.mxu0 0.0
    %788 = vmatpush1.msra.mxu0 0.0
    %789 = vmatprep.subr.mxu0 0.0
    %790 = vmatpush1.msra.mxu0 0.0
    %791 = vmatprep.subr.mxu0 0.0
    %792 = vmatpush1.msra.mxu0 0.0
    %793 = vmatprep.subr.mxu0 0.0
    %794 = vmatpush1.msra.mxu0 0.0
    %795 = vmatprep.mubr.f32.mxu0 0.0
    %796 = vmatmul.mubr.f32.gmra.mrb[0].mxu0 %v654
    %v797 = vpop.f32.mrb[0].mxu0
    %v798 = vadd.f32 0.0, %v797
    %v799 = vpop.f32.mrb[0].mxu0
    %v800 = vadd.f32 0.0, %v799
    %801 = vdwg.mxu0
    %v802 = vadd.f32 %v656, %v727
    %v803 = vadd.f32 %v657, %v729
    %v804 = vadd.f32 %v658, %v798
    %v805 = vadd.f32 %v659, %v800
    %v806 = vxor.u32 %v802, 2147483648
    %v807 = vxor.u32 %v803, 2147483648
    %v808 = vmul.f32 %v806, 1.442695
    %v809 = vpow.pop %v808
    %v810 = vmul.f32 %v807, 1.442695
    %v811 = vpow.pop %v810
    %v812 = vadd.f32 %v809, 1.0
    %v813 = vadd.f32 %v811, 1.0
    %v814 = vrcp.pop %v812
    %v815 = vmul.f32 1.0, %v814
    %v816 = vrcp.pop %v813
    %v817 = vmul.f32 1.0, %v816
    %v818 = vxor.u32 %v805, 2147483648
    %v819 = vmul.f32 %v818, 1.442695
    %v820 = vpow.pop %v819
    %v821 = vadd.f32 %v820, 1.0
    %v822 = vrcp.pop %v821
    %v823 = vmul.f32 1.0, %v822
    %v824 = vtanh.pop %v804
    %v825 = vmul.f32 %v817, %v652
    %v826 = vmul.f32 %v815, %v824
    %v827 = vadd.f32 %v825, %v826
    %v828 = vtanh.pop %v827
    %v829 = vmul.f32 %v823, %v828
    %s830 = scalar_lea.vmem [#allocation4], 128
    %v831 = vld [vmem:[%s830] sm:$0xff]
    %v832 = vld [vmem:[%s830 + $0x8] sm:$0xff]
    %v833 = vld [vmem:[%s830 + $0x10] sm:$0xff]
    %v834 = vld [vmem:[%s830 + $0x18] sm:$0xff]
    %835 = vmatprep.subr.mxu0 %v66
    %836 = vmatpush1.msra.mxu0 %v65
    %837 = vmatprep.subr.mxu0 %v70
    %838 = vmatpush1.msra.mxu0 %v69
    %839 = vmatprep.subr.mxu0 %v74
    %840 = vmatpush1.msra.mxu0 %v73
    %841 = vmatprep.subr.mxu0 %v78
    %842 = vmatpush1.msra.mxu0 %v77
    %843 = vmatprep.subr.mxu0 %v82
    %844 = vmatpush1.msra.mxu0 %v81
    %845 = vmatprep.subr.mxu0 %v86
    %846 = vmatpush1.msra.mxu0 %v85
    %847 = vmatprep.subr.mxu0 %v90
    %848 = vmatpush1.msra.mxu0 %v89
    %849 = vmatprep.subr.mxu0 %v94
    %850 = vmatpush1.msra.mxu0 %v93
    %851 = vmatprep.subr.mxu0 %v98
    %852 = vmatpush1.msra.mxu0 %v97
    %853 = vmatprep.subr.mxu0 %v102
    %854 = vmatpush1.msra.mxu0 %v101
    %855 = vmatprep.subr.mxu0 %v106
    %856 = vmatpush1.msra.mxu0 %v105
    %857 = vmatprep.subr.mxu0 %v110
    %858 = vmatpush1.msra.mxu0 %v109
    %859 = vmatprep.subr.mxu0 %v114
    %860 = vmatpush1.msra.mxu0 %v113
    %861 = vmatprep.subr.mxu0 %v118
    %862 = vmatpush1.msra.mxu0 %v117
    %863 = vmatprep.subr.mxu0 %v122
    %864 = vmatpush1.msra.mxu0 %v121
    %865 = vmatprep.subr.mxu0 %v126
    %866 = vmatpush1.msra.mxu0 %v125
    %867 = vmatprep.subr.mxu0 0.0
    %868 = vmatpush1.msra.mxu0 0.0
    %869 = vmatprep.subr.mxu0 0.0
    %870 = vmatpush1.msra.mxu0 0.0
    %871 = vmatprep.subr.mxu0 0.0
    %872 = vmatpush1.msra.mxu0 0.0
    %873 = vmatprep.subr.mxu0 0.0
    %874 = vmatpush1.msra.mxu0 0.0
    %875 = vmatprep.subr.mxu0 0.0
    %876 = vmatpush1.msra.mxu0 0.0
    %877 = vmatprep.subr.mxu0 0.0
    %878 = vmatpush1.msra.mxu0 0.0
    %879 = vmatprep.subr.mxu0 0.0
    %880 = vmatpush1.msra.mxu0 0.0
    %881 = vmatprep.subr.mxu0 0.0
    %882 = vmatpush1.msra.mxu0 0.0
    %883 = vmatprep.subr.mxu0 0.0
    %884 = vmatpush1.msra.mxu0 0.0
    %885 = vmatprep.subr.mxu0 0.0
    %886 = vmatpush1.msra.mxu0 0.0
    %887 = vmatprep.subr.mxu0 0.0
    %888 = vmatpush1.msra.mxu0 0.0
    %889 = vmatprep.subr.mxu0 0.0
    %890 = vmatpush1.msra.mxu0 0.0
    %891 = vmatprep.subr.mxu0 0.0
    %892 = vmatpush1.msra.mxu0 0.0
    %893 = vmatprep.subr.mxu0 0.0
    %894 = vmatpush1.msra.mxu0 0.0
    %895 = vmatprep.subr.mxu0 0.0
    %896 = vmatpush1.msra.mxu0 0.0
    %897 = vmatprep.subr.mxu0 0.0
    %898 = vmatpush1.msra.mxu0 0.0
    %899 = vmatprep.mubr.f32.mxu0 0.0
    %900 = vmatmul.mubr.f32.gmra.mrb[0].mxu0 %v829
    %v901 = vpop.f32.mrb[0].mxu0
    %v902 = vadd.f32 0.0, %v901
    %v903 = vpop.f32.mrb[0].mxu0
    %v904 = vadd.f32 0.0, %v903
    %905 = vdwg.mxu0
    %906 = vmatprep.subr.mxu0 %v68
    %907 = vmatpush1.msra.mxu0 %v67
    %908 = vmatprep.subr.mxu0 %v72
    %909 = vmatpush1.msra.mxu0 %v71
    %910 = vmatprep.subr.mxu0 %v76
    %911 = vmatpush1.msra.mxu0 %v75
    %912 = vmatprep.subr.mxu0 %v80
    %913 = vmatpush1.msra.mxu0 %v79
    %914 = vmatprep.subr.mxu0 %v84
    %915 = vmatpush1.msra.mxu0 %v83
    %916 = vmatprep.subr.mxu0 %v88
    %917 = vmatpush1.msra.mxu0 %v87
    %918 = vmatprep.subr.mxu0 %v92
    %919 = vmatpush1.msra.mxu0 %v91
    %920 = vmatprep.subr.mxu0 %v96
    %921 = vmatpush1.msra.mxu0 %v95
    %922 = vmatprep.subr.mxu0 %v100
    %923 = vmatpush1.msra.mxu0 %v99
    %924 = vmatprep.subr.mxu0 %v104
    %925 = vmatpush1.msra.mxu0 %v103
    %926 = vmatprep.subr.mxu0 %v108
    %927 = vmatpush1.msra.mxu0 %v107
    %928 = vmatprep.subr.mxu0 %v112
    %929 = vmatpush1.msra.mxu0 %v111
    %930 = vmatprep.subr.mxu0 %v116
    %931 = vmatpush1.msra.mxu0 %v115
    %932 = vmatprep.subr.mxu0 %v120
    %933 = vmatpush1.msra.mxu0 %v119
    %934 = vmatprep.subr.mxu0 %v124
    %935 = vmatpush1.msra.mxu0 %v123
    %936 = vmatprep.subr.mxu0 %v128
    %937 = vmatpush1.msra.mxu0 %v127
    %938 = vmatprep.subr.mxu0 0.0
    %939 = vmatpush1.msra.mxu0 0.0
    %940 = vmatprep.subr.mxu0 0.0
    %941 = vmatpush1.msra.mxu0 0.0
    %942 = vmatprep.subr.mxu0 0.0
    %943 = vmatpush1.msra.mxu0 0.0
    %944 = vmatprep.subr.mxu0 0.0
    %945 = vmatpush1.msra.mxu0 0.0
    %946 = vmatprep.subr.mxu0 0.0
    %947 = vmatpush1.msra.mxu0 0.0
    %948 = vmatprep.subr.mxu0 0.0
    %949 = vmatpush1.msra.mxu0 0.0
    %950 = vmatprep.subr.mxu0 0.0
    %951 = vmatpush1.msra.mxu0 0.0
    %952 = vmatprep.subr.mxu0 0.0
    %953 = vmatpush1.msra.mxu0 0.0
    %954 = vmatprep.subr.mxu0 0.0
    %955 = vmatpush1.msra.mxu0 0.0
    %956 = vmatprep.subr.mxu0 0.0
    %957 = vmatpush1.msra.mxu0 0.0
    %958 = vmatprep.subr.mxu0 0.0
    %959 = vmatpush1.msra.mxu0 0.0
    %960 = vmatprep.subr.mxu0 0.0
    %961 = vmatpush1.msra.mxu0 0.0
    %962 = vmatprep.subr.mxu0 0.0
    %963 = vmatpush1.msra.mxu0 0.0
    %964 = vmatprep.subr.mxu0 0.0
    %965 = vmatpush1.msra.mxu0 0.0
    %966 = vmatprep.subr.mxu0 0.0
    %967 = vmatpush1.msra.mxu0 0.0
    %968 = vmatprep.subr.mxu0 0.0
    %969 = vmatpush1.msra.mxu0 0.0
    %970 = vmatprep.mubr.f32.mxu0 0.0
    %971 = vmatmul.mubr.f32.gmra.mrb[0].mxu0 %v829
    %v972 = vpop.f32.mrb[0].mxu0
    %v973 = vadd.f32 0.0, %v972
    %v974 = vpop.f32.mrb[0].mxu0
    %v975 = vadd.f32 0.0, %v974
    %976 = vdwg.mxu0
    %v977 = vadd.f32 %v831, %v902
    %v978 = vadd.f32 %v832, %v904
    %v979 = vadd.f32 %v833, %v973
    %v980 = vadd.f32 %v834, %v975
    %v981 = vxor.u32 %v977, 2147483648
    %v982 = vxor.u32 %v978, 2147483648
    %v983 = vmul.f32 %v981, 1.442695
    %v984 = vpow.pop %v983
    %v985 = vmul.f32 %v982, 1.442695
    %v986 = vpow.pop %v985
    %v987 = vadd.f32 %v984, 1.0
    %v988 = vadd.f32 %v986, 1.0
    %v989 = vrcp.pop %v987
    %v990 = vmul.f32 1.0, %v989
    %v991 = vrcp.pop %v988
    %v992 = vmul.f32 1.0, %v991
    %v993 = vxor.u32 %v980, 2147483648
    %v994 = vmul.f32 %v993, 1.442695
    %v995 = vpow.pop %v994
    %v996 = vadd.f32 %v995, 1.0
    %v997 = vrcp.pop %v996
    %v998 = vmul.f32 1.0, %v997
    %v999 = vtanh.pop %v979
    %v1000 = vmul.f32 %v992, %v827
    %v1001 = vmul.f32 %v990, %v999
    %v1002 = vadd.f32 %v1000, %v1001
    %v1003 = vtanh.pop %v1002
    %v1004 = vmul.f32 %v998, %v1003
    %s1005 = scalar_lea.vmem [#allocation4], 160
    %v1006 = vld [vmem:[%s1005] sm:$0xff]
    %v1007 = vld [vmem:[%s1005 + $0x8] sm:$0xff]
    %v1008 = vld [vmem:[%s1005 + $0x10] sm:$0xff]
    %v1009 = vld [vmem:[%s1005 + $0x18] sm:$0xff]
    %1010 = vmatprep.subr.mxu0 %v66
    %1011 = vmatpush1.msra.mxu0 %v65
    %1012 = vmatprep.subr.mxu0 %v70
    %1013 = vmatpush1.msra.mxu0 %v69
    %1014 = vmatprep.subr.mxu0 %v74
    %1015 = vmatpush1.msra.mxu0 %v73
    %1016 = vmatprep.subr.mxu0 %v78
    %1017 = vmatpush1.msra.mxu0 %v77
    %1018 = vmatprep.subr.mxu0 %v82
    %1019 = vmatpush1.msra.mxu0 %v81
    %1020 = vmatprep.subr.mxu0 %v86
    %1021 = vmatpush1.msra.mxu0 %v85
    %1022 = vmatprep.subr.mxu0 %v90
    %1023 = vmatpush1.msra.mxu0 %v89
    %1024 = vmatprep.subr.mxu0 %v94
    %1025 = vmatpush1.msra.mxu0 %v93
    %1026 = vmatprep.subr.mxu0 %v98
    %1027 = vmatpush1.msra.mxu0 %v97
    %1028 = vmatprep.subr.mxu0 %v102
    %1029 = vmatpush1.msra.mxu0 %v101
    %1030 = vmatprep.subr.mxu0 %v106
    %1031 = vmatpush1.msra.mxu0 %v105
    %1032 = vmatprep.subr.mxu0 %v110
    %1033 = vmatpush1.msra.mxu0 %v109
    %1034 = vmatprep.subr.mxu0 %v114
    %1035 = vmatpush1.msra.mxu0 %v113
    %1036 = vmatprep.subr.mxu0 %v118
    %1037 = vmatpush1.msra.mxu0 %v117
    %1038 = vmatprep.subr.mxu0 %v122
    %1039 = vmatpush1.msra.mxu0 %v121
    %1040 = vmatprep.subr.mxu0 %v126
    %1041 = vmatpush1.msra.mxu0 %v125
    %1042 = vmatprep.subr.mxu0 0.0
    %1043 = vmatpush1.msra.mxu0 0.0
    %1044 = vmatprep.subr.mxu0 0.0
    %1045 = vmatpush1.msra.mxu0 0.0
    %1046 = vmatprep.subr.mxu0 0.0
    %1047 = vmatpush1.msra.mxu0 0.0
    %1048 = vmatprep.subr.mxu0 0.0
    %1049 = vmatpush1.msra.mxu0 0.0
    %1050 = vmatprep.subr.mxu0 0.0
    %1051 = vmatpush1.msra.mxu0 0.0
    %1052 = vmatprep.subr.mxu0 0.0
    %1053 = vmatpush1.msra.mxu0 0.0
    %1054 = vmatprep.subr.mxu0 0.0
    %1055 = vmatpush1.msra.mxu0 0.0
    %1056 = vmatprep.subr.mxu0 0.0
    %1057 = vmatpush1.msra.mxu0 0.0
    %1058 = vmatprep.subr.mxu0 0.0
    %1059 = vmatpush1.msra.mxu0 0.0
    %1060 = vmatprep.subr.mxu0 0.0
    %1061 = vmatpush1.msra.mxu0 0.0
    %1062 = vmatprep.subr.mxu0 0.0
    %1063 = vmatpush1.msra.mxu0 0.0
    %1064 = vmatprep.subr.mxu0 0.0
    %1065 = vmatpush1.msra.mxu0 0.0
    %1066 = vmatprep.subr.mxu0 0.0
    %1067 = vmatpush1.msra.mxu0 0.0
    %1068 = vmatprep.subr.mxu0 0.0
    %1069 = vmatpush1.msra.mxu0 0.0
    %1070 = vmatprep.subr.mxu0 0.0
    %1071 = vmatpush1.msra.mxu0 0.0
    %1072 = vmatprep.subr.mxu0 0.0
    %1073 = vmatpush1.msra.mxu0 0.0
    %1074 = vmatprep.mubr.f32.mxu0 0.0
    %1075 = vmatmul.mubr.f32.gmra.mrb[0].mxu0 %v1004
    %v1076 = vpop.f32.mrb[0].mxu0
    %v1077 = vadd.f32 0.0, %v1076
    %v1078 = vpop.f32.mrb[0].mxu0
    %v1079 = vadd.f32 0.0, %v1078
    %1080 = vdwg.mxu0
    %1081 = vmatprep.subr.mxu0 %v68
    %1082 = vmatpush1.msra.mxu0 %v67
    %1083 = vmatprep.subr.mxu0 %v72
    %1084 = vmatpush1.msra.mxu0 %v71
    %1085 = vmatprep.subr.mxu0 %v76
    %1086 = vmatpush1.msra.mxu0 %v75
    %1087 = vmatprep.subr.mxu0 %v80
    %1088 = vmatpush1.msra.mxu0 %v79
    %1089 = vmatprep.subr.mxu0 %v84
    %1090 = vmatpush1.msra.mxu0 %v83
    %1091 = vmatprep.subr.mxu0 %v88
    %1092 = vmatpush1.msra.mxu0 %v87
    %1093 = vmatprep.subr.mxu0 %v92
    %1094 = vmatpush1.msra.mxu0 %v91
    %1095 = vmatprep.subr.mxu0 %v96
    %1096 = vmatpush1.msra.mxu0 %v95
    %1097 = vmatprep.subr.mxu0 %v100
    %1098 = vmatpush1.msra.mxu0 %v99
    %1099 = vmatprep.subr.mxu0 %v104
    %1100 = vmatpush1.msra.mxu0 %v103
    %1101 = vmatprep.subr.mxu0 %v108
    %1102 = vmatpush1.msra.mxu0 %v107
    %1103 = vmatprep.subr.mxu0 %v112
    %1104 = vmatpush1.msra.mxu0 %v111
    %1105 = vmatprep.subr.mxu0 %v116
    %1106 = vmatpush1.msra.mxu0 %v115
    %1107 = vmatprep.subr.mxu0 %v120
    %1108 = vmatpush1.msra.mxu0 %v119
    %1109 = vmatprep.subr.mxu0 %v124
    %1110 = vmatpush1.msra.mxu0 %v123
    %1111 = vmatprep.subr.mxu0 %v128
    %1112 = vmatpush1.msra.mxu0 %v127
    %1113 = vmatprep.subr.mxu0 0.0
    %1114 = vmatpush1.msra.mxu0 0.0
    %1115 = vmatprep.subr.mxu0 0.0
    %1116 = vmatpush1.msra.mxu0 0.0
    %1117 = vmatprep.subr.mxu0 0.0
    %1118 = vmatpush1.msra.mxu0 0.0
    %1119 = vmatprep.subr.mxu0 0.0
    %1120 = vmatpush1.msra.mxu0 0.0
    %1121 = vmatprep.subr.mxu0 0.0
    %1122 = vmatpush1.msra.mxu0 0.0
    %1123 = vmatprep.subr.mxu0 0.0
    %1124 = vmatpush1.msra.mxu0 0.0
    %1125 = vmatprep.subr.mxu0 0.0
    %1126 = vmatpush1.msra.mxu0 0.0
    %1127 = vmatprep.subr.mxu0 0.0
    %1128 = vmatpush1.msra.mxu0 0.0
    %1129 = vmatprep.subr.mxu0 0.0
    %1130 = vmatpush1.msra.mxu0 0.0
    %1131 = vmatprep.subr.mxu0 0.0
    %1132 = vmatpush1.msra.mxu0 0.0
    %1133 = vmatprep.subr.mxu0 0.0
    %1134 = vmatpush1.msra.mxu0 0.0
    %1135 = vmatprep.subr.mxu0 0.0
    %1136 = vmatpush1.msra.mxu0 0.0
    %1137 = vmatprep.subr.mxu0 0.0
    %1138 = vmatpush1.msra.mxu0 0.0
    %1139 = vmatprep.subr.mxu0 0.0
    %1140 = vmatpush1.msra.mxu0 0.0
    %1141 = vmatprep.subr.mxu0 0.0
    %1142 = vmatpush1.msra.mxu0 0.0
    %1143 = vmatprep.subr.mxu0 0.0
    %1144 = vmatpush1.msra.mxu0 0.0
    %1145 = vmatprep.mubr.f32.mxu0 0.0
    %1146 = vmatmul.mubr.f32.gmra.mrb[0].mxu0 %v1004
    %v1147 = vpop.f32.mrb[0].mxu0
    %v1148 = vadd.f32 0.0, %v1147
    %v1149 = vpop.f32.mrb[0].mxu0
    %v1150 = vadd.f32 0.0, %v1149
    %1151 = vdwg.mxu0
    %v1152 = vadd.f32 %v1006, %v1077
    %v1153 = vadd.f32 %v1007, %v1079
    %v1154 = vadd.f32 %v1008, %v1148
    %v1155 = vadd.f32 %v1009, %v1150
    %v1156 = vxor.u32 %v1152, 2147483648
    %v1157 = vxor.u32 %v1153, 2147483648
    %v1158 = vmul.f32 %v1156, 1.442695
    %v1159 = vpow.pop %v1158
    %v1160 = vmul.f32 %v1157, 1.442695
    %v1161 = vpow.pop %v1160
    %v1162 = vadd.f32 %v1159, 1.0
    %v1163 = vadd.f32 %v1161, 1.0
    %v1164 = vrcp.pop %v1162
    %v1165 = vmul.f32 1.0, %v1164
    %v1166 = vrcp.pop %v1163
    %v1167 = vmul.f32 1.0, %v1166
    %v1168 = vxor.u32 %v1155, 2147483648
    %v1169 = vmul.f32 %v1168, 1.442695
    %v1170 = vpow.pop %v1169
    %v1171 = vadd.f32 %v1170, 1.0
    %v1172 = vrcp.pop %v1171
    %v1173 = vmul.f32 1.0, %v1172
    %v1174 = vtanh.pop %v1154
    %v1175 = vmul.f32 %v1167, %v1002
    %v1176 = vmul.f32 %v1165, %v1174
    %v1177 = vadd.f32 %v1175, %v1176
    %v1178 = vtanh.pop %v1177
    %v1179 = vmul.f32 %v1173, %v1178
    %s1180 = scalar_lea.vmem [#allocation4], 192
    %v1181 = vld [vmem:[%s1180] sm:$0xff]
    %v1182 = vld [vmem:[%s1180 + $0x8] sm:$0xff]
    %v1183 = vld [vmem:[%s1180 + $0x10] sm:$0xff]
    %v1184 = vld [vmem:[%s1180 + $0x18] sm:$0xff]
    %1185 = vmatprep.subr.mxu0 %v66
    %1186 = vmatpush1.msra.mxu0 %v65
    %1187 = vmatprep.subr.mxu0 %v70
    %1188 = vmatpush1.msra.mxu0 %v69
    %1189 = vmatprep.subr.mxu0 %v74
    %1190 = vmatpush1.msra.mxu0 %v73
    %1191 = vmatprep.subr.mxu0 %v78
    %1192 = vmatpush1.msra.mxu0 %v77
    %1193 = vmatprep.subr.mxu0 %v82
    %1194 = vmatpush1.msra.mxu0 %v81
    %1195 = vmatprep.subr.mxu0 %v86
    %1196 = vmatpush1.msra.mxu0 %v85
    %1197 = vmatprep.subr.mxu0 %v90
    %1198 = vmatpush1.msra.mxu0 %v89
    %1199 = vmatprep.subr.mxu0 %v94
    %1200 = vmatpush1.msra.mxu0 %v93
    %1201 = vmatprep.subr.mxu0 %v98
    %1202 = vmatpush1.msra.mxu0 %v97
    %1203 = vmatprep.subr.mxu0 %v102
    %1204 = vmatpush1.msra.mxu0 %v101
    %1205 = vmatprep.subr.mxu0 %v106
    %1206 = vmatpush1.msra.mxu0 %v105
    %1207 = vmatprep.subr.mxu0 %v110
    %1208 = vmatpush1.msra.mxu0 %v109
    %1209 = vmatprep.subr.mxu0 %v114
    %1210 = vmatpush1.msra.mxu0 %v113
    %1211 = vmatprep.subr.mxu0 %v118
    %1212 = vmatpush1.msra.mxu0 %v117
    %1213 = vmatprep.subr.mxu0 %v122
    %1214 = vmatpush1.msra.mxu0 %v121
    %1215 = vmatprep.subr.mxu0 %v126
    %1216 = vmatpush1.msra.mxu0 %v125
    %1217 = vmatprep.subr.mxu0 0.0
    %1218 = vmatpush1.msra.mxu0 0.0
    %1219 = vmatprep.subr.mxu0 0.0
    %1220 = vmatpush1.msra.mxu0 0.0
    %1221 = vmatprep.subr.mxu0 0.0
    %1222 = vmatpush1.msra.mxu0 0.0
    %1223 = vmatprep.subr.mxu0 0.0
    %1224 = vmatpush1.msra.mxu0 0.0
    %1225 = vmatprep.subr.mxu0 0.0
    %1226 = vmatpush1.msra.mxu0 0.0
    %1227 = vmatprep.subr.mxu0 0.0
    %1228 = vmatpush1.msra.mxu0 0.0
    %1229 = vmatprep.subr.mxu0 0.0
    %1230 = vmatpush1.msra.mxu0 0.0
    %1231 = vmatprep.subr.mxu0 0.0
    %1232 = vmatpush1.msra.mxu0 0.0
    %1233 = vmatprep.subr.mxu0 0.0
    %1234 = vmatpush1.msra.mxu0 0.0
    %1235 = vmatprep.subr.mxu0 0.0
    %1236 = vmatpush1.msra.mxu0 0.0
    %1237 = vmatprep.subr.mxu0 0.0
    %1238 = vmatpush1.msra.mxu0 0.0
    %1239 = vmatprep.subr.mxu0 0.0
    %1240 = vmatpush1.msra.mxu0 0.0
    %1241 = vmatprep.subr.mxu0 0.0
    %1242 = vmatpush1.msra.mxu0 0.0
    %1243 = vmatprep.subr.mxu0 0.0
    %1244 = vmatpush1.msra.mxu0 0.0
    %1245 = vmatprep.subr.mxu0 0.0
    %1246 = vmatpush1.msra.mxu0 0.0
    %1247 = vmatprep.subr.mxu0 0.0
    %1248 = vmatpush1.msra.mxu0 0.0
    %1249 = vmatprep.mubr.f32.mxu0 0.0
    %1250 = vmatmul.mubr.f32.gmra.mrb[0].mxu0 %v1179
    %v1251 = vpop.f32.mrb[0].mxu0
    %v1252 = vadd.f32 0.0, %v1251
    %v1253 = vpop.f32.mrb[0].mxu0
    %v1254 = vadd.f32 0.0, %v1253
    %1255 = vdwg.mxu0
    %1256 = vmatprep.subr.mxu0 %v68
    %1257 = vmatpush1.msra.mxu0 %v67
    %1258 = vmatprep.subr.mxu0 %v72
    %1259 = vmatpush1.msra.mxu0 %v71
    %1260 = vmatprep.subr.mxu0 %v76
    %1261 = vmatpush1.msra.mxu0 %v75
    %1262 = vmatprep.subr.mxu0 %v80
    %1263 = vmatpush1.msra.mxu0 %v79
    %1264 = vmatprep.subr.mxu0 %v84
    %1265 = vmatpush1.msra.mxu0 %v83
    %1266 = vmatprep.subr.mxu0 %v88
    %1267 = vmatpush1.msra.mxu0 %v87
    %1268 = vmatprep.subr.mxu0 %v92
    %1269 = vmatpush1.msra.mxu0 %v91
    %1270 = vmatprep.subr.mxu0 %v96
    %1271 = vmatpush1.msra.mxu0 %v95
    %1272 = vmatprep.subr.mxu0 %v100
    %1273 = vmatpush1.msra.mxu0 %v99
    %1274 = vmatprep.subr.mxu0 %v104
    %1275 = vmatpush1.msra.mxu0 %v103
    %1276 = vmatprep.subr.mxu0 %v108
    %1277 = vmatpush1.msra.mxu0 %v107
    %1278 = vmatprep.subr.mxu0 %v112
    %1279 = vmatpush1.msra.mxu0 %v111
    %1280 = vmatprep.subr.mxu0 %v116
    %1281 = vmatpush1.msra.mxu0 %v115
    %1282 = vmatprep.subr.mxu0 %v120
    %1283 = vmatpush1.msra.mxu0 %v119
    %1284 = vmatprep.subr.mxu0 %v124
    %1285 = vmatpush1.msra.mxu0 %v123
    %1286 = vmatprep.subr.mxu0 %v128
    %1287 = vmatpush1.msra.mxu0 %v127
    %1288 = vmatprep.subr.mxu0 0.0
    %1289 = vmatpush1.msra.mxu0 0.0
    %1290 = vmatprep.subr.mxu0 0.0
    %1291 = vmatpush1.msra.mxu0 0.0
    %1292 = vmatprep.subr.mxu0 0.0
    %1293 = vmatpush1.msra.mxu0 0.0
    %1294 = vmatprep.subr.mxu0 0.0
    %1295 = vmatpush1.msra.mxu0 0.0
    %1296 = vmatprep.subr.mxu0 0.0
    %1297 = vmatpush1.msra.mxu0 0.0
    %1298 = vmatprep.subr.mxu0 0.0
    %1299 = vmatpush1.msra.mxu0 0.0
    %1300 = vmatprep.subr.mxu0 0.0
    %1301 = vmatpush1.msra.mxu0 0.0
    %1302 = vmatprep.subr.mxu0 0.0
    %1303 = vmatpush1.msra.mxu0 0.0
    %1304 = vmatprep.subr.mxu0 0.0
    %1305 = vmatpush1.msra.mxu0 0.0
    %1306 = vmatprep.subr.mxu0 0.0
    %1307 = vmatpush1.msra.mxu0 0.0
    %1308 = vmatprep.subr.mxu0 0.0
    %1309 = vmatpush1.msra.mxu0 0.0
    %1310 = vmatprep.subr.mxu0 0.0
    %1311 = vmatpush1.msra.mxu0 0.0
    %1312 = vmatprep.subr.mxu0 0.0
    %1313 = vmatpush1.msra.mxu0 0.0
    %1314 = vmatprep.subr.mxu0 0.0
    %1315 = vmatpush1.msra.mxu0 0.0
    %1316 = vmatprep.subr.mxu0 0.0
    %1317 = vmatpush1.msra.mxu0 0.0
    %1318 = vmatprep.subr.mxu0 0.0
    %1319 = vmatpush1.msra.mxu0 0.0
    %1320 = vmatprep.mubr.f32.mxu0 0.0
    %1321 = vmatmul.mubr.f32.gmra.mrb[0].mxu0 %v1179
    %v1322 = vpop.f32.mrb[0].mxu0
    %v1323 = vadd.f32 0.0, %v1322
    %v1324 = vpop.f32.mrb[0].mxu0
    %v1325 = vadd.f32 0.0, %v1324
    %1326 = vdwg.mxu0
    %v1327 = vadd.f32 %v1181, %v1252
    %v1328 = vadd.f32 %v1182, %v1254
    %v1329 = vadd.f32 %v1183, %v1323
    %v1330 = vadd.f32 %v1184, %v1325
    %v1331 = vxor.u32 %v1327, 2147483648
    %v1332 = vxor.u32 %v1328, 2147483648
    %v1333 = vmul.f32 %v1331, 1.442695
    %v1334 = vpow.pop %v1333
    %v1335 = vmul.f32 %v1332, 1.442695
    %v1336 = vpow.pop %v1335
    %v1337 = vadd.f32 %v1334, 1.0
    %v1338 = vadd.f32 %v1336, 1.0
    %v1339 = vrcp.pop %v1337
    %v1340 = vmul.f32 1.0, %v1339
    %v1341 = vrcp.pop %v1338
    %v1342 = vmul.f32 1.0, %v1341
    %v1343 = vxor.u32 %v1330, 2147483648
    %v1344 = vmul.f32 %v1343, 1.442695
    %v1345 = vpow.pop %v1344
    %v1346 = vadd.f32 %v1345, 1.0
    %v1347 = vrcp.pop %v1346
    %v1348 = vmul.f32 1.0, %v1347
    %v1349 = vtanh.pop %v1329
    %v1350 = vmul.f32 %v1342, %v1177
    %v1351 = vmul.f32 %v1340, %v1349
    %v1352 = vadd.f32 %v1350, %v1351
    %v1353 = vtanh.pop %v1352
    %v1354 = vmul.f32 %v1348, %v1353
    %s1355 = scalar_lea.vmem [#allocation4], 224
    %v1356 = vld [vmem:[%s1355] sm:$0xff]
    %v1357 = vld [vmem:[%s1355 + $0x8] sm:$0xff]
    %v1358 = vld [vmem:[%s1355 + $0x10] sm:$0xff]
    %v1359 = vld [vmem:[%s1355 + $0x18] sm:$0xff]
    %1360 = vmatprep.subr.mxu0 %v66
    %1361 = vmatpush1.msra.mxu0 %v65
    %1362 = vmatprep.subr.mxu0 %v70
    %1363 = vmatpush1.msra.mxu0 %v69
    %1364 = vmatprep.subr.mxu0 %v74
    %1365 = vmatpush1.msra.mxu0 %v73
    %1366 = vmatprep.subr.mxu0 %v78
    %1367 = vmatpush1.msra.mxu0 %v77
    %1368 = vmatprep.subr.mxu0 %v82
    %1369 = vmatpush1.msra.mxu0 %v81
    %1370 = vmatprep.subr.mxu0 %v86
    %1371 = vmatpush1.msra.mxu0 %v85
    %1372 = vmatprep.subr.mxu0 %v90
    %1373 = vmatpush1.msra.mxu0 %v89
    %1374 = vmatprep.subr.mxu0 %v94
    %1375 = vmatpush1.msra.mxu0 %v93
    %1376 = vmatprep.subr.mxu0 %v98
    %1377 = vmatpush1.msra.mxu0 %v97
    %1378 = vmatprep.subr.mxu0 %v102
    %1379 = vmatpush1.msra.mxu0 %v101
    %1380 = vmatprep.subr.mxu0 %v106
    %1381 = vmatpush1.msra.mxu0 %v105
    %1382 = vmatprep.subr.mxu0 %v110
    %1383 = vmatpush1.msra.mxu0 %v109
    %1384 = vmatprep.subr.mxu0 %v114
    %1385 = vmatpush1.msra.mxu0 %v113
    %1386 = vmatprep.subr.mxu0 %v118
    %1387 = vmatpush1.msra.mxu0 %v117
    %1388 = vmatprep.subr.mxu0 %v122
    %1389 = vmatpush1.msra.mxu0 %v121
    %1390 = vmatprep.subr.mxu0 %v126
    %1391 = vmatpush1.msra.mxu0 %v125
    %1392 = vmatprep.subr.mxu0 0.0
    %1393 = vmatpush1.msra.mxu0 0.0
    %1394 = vmatprep.subr.mxu0 0.0
    %1395 = vmatpush1.msra.mxu0 0.0
    %1396 = vmatprep.subr.mxu0 0.0
    %1397 = vmatpush1.msra.mxu0 0.0
    %1398 = vmatprep.subr.mxu0 0.0
    %1399 = vmatpush1.msra.mxu0 0.0
    %1400 = vmatprep.subr.mxu0 0.0
    %1401 = vmatpush1.msra.mxu0 0.0
    %1402 = vmatprep.subr.mxu0 0.0
    %1403 = vmatpush1.msra.mxu0 0.0
    %1404 = vmatprep.subr.mxu0 0.0
    %1405 = vmatpush1.msra.mxu0 0.0
    %1406 = vmatprep.subr.mxu0 0.0
    %1407 = vmatpush1.msra.mxu0 0.0
    %1408 = vmatprep.subr.mxu0 0.0
    %1409 = vmatpush1.msra.mxu0 0.0
    %1410 = vmatprep.subr.mxu0 0.0
    %1411 = vmatpush1.msra.mxu0 0.0
    %1412 = vmatprep.subr.mxu0 0.0
    %1413 = vmatpush1.msra.mxu0 0.0
    %1414 = vmatprep.subr.mxu0 0.0
    %1415 = vmatpush1.msra.mxu0 0.0
    %1416 = vmatprep.subr.mxu0 0.0
    %1417 = vmatpush1.msra.mxu0 0.0
    %1418 = vmatprep.subr.mxu0 0.0
    %1419 = vmatpush1.msra.mxu0 0.0
    %1420 = vmatprep.subr.mxu0 0.0
    %1421 = vmatpush1.msra.mxu0 0.0
    %1422 = vmatprep.subr.mxu0 0.0
    %1423 = vmatpush1.msra.mxu0 0.0
    %1424 = vmatprep.mubr.f32.mxu0 0.0
    %1425 = vmatmul.mubr.f32.gmra.mrb[0].mxu0 %v1354
    %v1426 = vpop.f32.mrb[0].mxu0
    %v1427 = vadd.f32 0.0, %v1426
    %v1428 = vpop.f32.mrb[0].mxu0
    %v1429 = vadd.f32 0.0, %v1428
    %1430 = vdwg.mxu0
    %1431 = vmatprep.subr.mxu0 %v68
    %1432 = vmatpush1.msra.mxu0 %v67
    %1433 = vmatprep.subr.mxu0 %v72
    %1434 = vmatpush1.msra.mxu0 %v71
    %1435 = vmatprep.subr.mxu0 %v76
    %1436 = vmatpush1.msra.mxu0 %v75
    %1437 = vmatprep.subr.mxu0 %v80
    %1438 = vmatpush1.msra.mxu0 %v79
    %1439 = vmatprep.subr.mxu0 %v84
    %1440 = vmatpush1.msra.mxu0 %v83
    %1441 = vmatprep.subr.mxu0 %v88
    %1442 = vmatpush1.msra.mxu0 %v87
    %1443 = vmatprep.subr.mxu0 %v92
    %1444 = vmatpush1.msra.mxu0 %v91
    %1445 = vmatprep.subr.mxu0 %v96
    %1446 = vmatpush1.msra.mxu0 %v95
    %1447 = vmatprep.subr.mxu0 %v100
    %1448 = vmatpush1.msra.mxu0 %v99
    %1449 = vmatprep.subr.mxu0 %v104
    %1450 = vmatpush1.msra.mxu0 %v103
    %1451 = vmatprep.subr.mxu0 %v108
    %1452 = vmatpush1.msra.mxu0 %v107
    %1453 = vmatprep.subr.mxu0 %v112
    %1454 = vmatpush1.msra.mxu0 %v111
    %1455 = vmatprep.subr.mxu0 %v116
    %1456 = vmatpush1.msra.mxu0 %v115
    %1457 = vmatprep.subr.mxu0 %v120
    %1458 = vmatpush1.msra.mxu0 %v119
    %1459 = vmatprep.subr.mxu0 %v124
    %1460 = vmatpush1.msra.mxu0 %v123
    %1461 = vmatprep.subr.mxu0 %v128
    %1462 = vmatpush1.msra.mxu0 %v127
    %1463 = vmatprep.subr.mxu0 0.0
    %1464 = vmatpush1.msra.mxu0 0.0
    %1465 = vmatprep.subr.mxu0 0.0
    %1466 = vmatpush1.msra.mxu0 0.0
    %1467 = vmatprep.subr.mxu0 0.0
    %1468 = vmatpush1.msra.mxu0 0.0
    %1469 = vmatprep.subr.mxu0 0.0
    %1470 = vmatpush1.msra.mxu0 0.0
    %1471 = vmatprep.subr.mxu0 0.0
    %1472 = vmatpush1.msra.mxu0 0.0
    %1473 = vmatprep.subr.mxu0 0.0
    %1474 = vmatpush1.msra.mxu0 0.0
    %1475 = vmatprep.subr.mxu0 0.0
    %1476 = vmatpush1.msra.mxu0 0.0
    %1477 = vmatprep.subr.mxu0 0.0
    %1478 = vmatpush1.msra.mxu0 0.0
    %1479 = vmatprep.subr.mxu0 0.0
    %1480 = vmatpush1.msra.mxu0 0.0
    %1481 = vmatprep.subr.mxu0 0.0
    %1482 = vmatpush1.msra.mxu0 0.0
    %1483 = vmatprep.subr.mxu0 0.0
    %1484 = vmatpush1.msra.mxu0 0.0
    %1485 = vmatprep.subr.mxu0 0.0
    %1486 = vmatpush1.msra.mxu0 0.0
    %1487 = vmatprep.subr.mxu0 0.0
    %1488 = vmatpush1.msra.mxu0 0.0
    %1489 = vmatprep.subr.mxu0 0.0
    %1490 = vmatpush1.msra.mxu0 0.0
    %1491 = vmatprep.subr.mxu0 0.0
    %1492 = vmatpush1.msra.mxu0 0.0
    %1493 = vmatprep.subr.mxu0 0.0
    %1494 = vmatpush1.msra.mxu0 0.0
    %1495 = vmatprep.mubr.f32.mxu0 0.0
    %1496 = vmatmul.mubr.f32.gmra.mrb[0].mxu0 %v1354
    %v1497 = vpop.f32.mrb[0].mxu0
    %v1498 = vadd.f32 0.0, %v1497
    %v1499 = vpop.f32.mrb[0].mxu0
    %v1500 = vadd.f32 0.0, %v1499
    %1501 = vdwg.mxu0
    %v1502 = vadd.f32 %v1356, %v1427
    %v1503 = vadd.f32 %v1357, %v1429
    %v1504 = vadd.f32 %v1358, %v1498
    %v1505 = vadd.f32 %v1359, %v1500
    %v1506 = vxor.u32 %v1502, 2147483648
    %v1507 = vxor.u32 %v1503, 2147483648
    %v1508 = vmul.f32 %v1506, 1.442695
    %v1509 = vpow.pop %v1508
    %v1510 = vmul.f32 %v1507, 1.442695
    %v1511 = vpow.pop %v1510
    %v1512 = vadd.f32 %v1509, 1.0
    %v1513 = vadd.f32 %v1511, 1.0
    %v1514 = vrcp.pop %v1512
    %v1515 = vmul.f32 1.0, %v1514
    %v1516 = vrcp.pop %v1513
    %v1517 = vmul.f32 1.0, %v1516
    %v1518 = vxor.u32 %v1505, 2147483648
    %v1519 = vmul.f32 %v1518, 1.442695
    %v1520 = vpow.pop %v1519
    %v1521 = vadd.f32 %v1520, 1.0
    %v1522 = vrcp.pop %v1521
    %v1523 = vmul.f32 1.0, %v1522
    %v1524 = vtanh.pop %v1504
    %v1525 = vmul.f32 %v1517, %v1352
    %v1526 = vmul.f32 %v1515, %v1524
    %v1527 = vadd.f32 %v1525, %v1526
    %v1528 = vtanh.pop %v1527
    %v1529 = vmul.f32 %v1523, %v1528
    %1530 = vst [vmem:[#allocation2] sm:$0xff] %v1529
    %1531 = vst [vmem:[#allocation3] sm:$0xff] %v1527
    // Predicated region
    $region34: #{tpu_custom_call.1} parent=1 // pred_check
      %p1532 = pneg %p59
    $region35: #{tpu_custom_call.1} parent=1 // pred_check_branch
      %1534 = sbr.rel (%p1532) target = $region37
    $region36: #{tpu_custom_call.1} parent=1 // pred_region
      %v1535 = vld [vmem:[#allocation2] sm:$0xff]
      %v1536 = vld [vmem:[#allocation9] sm:$0xff]
      %v1537 = vld [vmem:[#allocation9 + $0x8] sm:$0xff]
      %v1538 = vld [vmem:[#allocation9 + $0x10] sm:$0xff]
      %v1539 = vld [vmem:[#allocation9 + $0x18] sm:$0xff]
      %v1540 = vld [vmem:[#allocation9 + $0x20] sm:$0xff]
      %v1541 = vld [vmem:[#allocation9 + $0x28] sm:$0xff]
      %v1542 = vld [vmem:[#allocation9 + $0x30] sm:$0xff]
      %v1543 = vld [vmem:[#allocation9 + $0x38] sm:$0xff]
      %v1544 = vld [vmem:[#allocation9 + $0x40] sm:$0xff]
      %v1545 = vld [vmem:[#allocation9 + $0x48] sm:$0xff]
      %v1546 = vld [vmem:[#allocation9 + $0x50] sm:$0xff]
      %v1547 = vld [vmem:[#allocation9 + $0x58] sm:$0xff]
      %v1548 = vld [vmem:[#allocation9 + $0x60] sm:$0xff]
      %v1549 = vld [vmem:[#allocation9 + $0x68] sm:$0xff]
      %v1550 = vld [vmem:[#allocation9 + $0x70] sm:$0xff]
      %v1551 = vld [vmem:[#allocation9 + $0x78] sm:$0xff]
      %v1552 = vld [vmem:[%s3] sm:$0x1]
      %v1554 = vlaneseq
      %v1555 = vshrl.u32 %v1554, 7
      %v1556 = vsub.s32 0, %v1555
      %v1557 = vrot.slane %v1552, %v1556
      %1559 = vmatprep.subr.mxu0 0.0
      %1560 = vmatpush1.msra.mxu0 %v1536
      %1561 = vmatprep.subr.mxu0 0.0
      %1562 = vmatpush1.msra.mxu0 %v1537
      %1563 = vmatprep.subr.mxu0 0.0
      %1564 = vmatpush1.msra.mxu0 %v1538
      %1565 = vmatprep.subr.mxu0 0.0
      %1566 = vmatpush1.msra.mxu0 %v1539
      %1567 = vmatprep.subr.mxu0 0.0
      %1568 = vmatpush1.msra.mxu0 %v1540
      %1569 = vmatprep.subr.mxu0 0.0
      %1570 = vmatpush1.msra.mxu0 %v1541
      %1571 = vmatprep.subr.mxu0 0.0
      %1572 = vmatpush1.msra.mxu0 %v1542
      %1573 = vmatprep.subr.mxu0 0.0
      %1574 = vmatpush1.msra.mxu0 %v1543
      %1575 = vmatprep.subr.mxu0 0.0
      %1576 = vmatpush1.msra.mxu0 %v1544
      %1577 = vmatprep.subr.mxu0 0.0
      %1578 = vmatpush1.msra.mxu0 %v1545
      %1579 = vmatprep.subr.mxu0 0.0
      %1580 = vmatpush1.msra.mxu0 %v1546
      %1581 = vmatprep.subr.mxu0 0.0
      %1582 = vmatpush1.msra.mxu0 %v1547
      %1583 = vmatprep.subr.mxu0 0.0
      %1584 = vmatpush1.msra.mxu0 %v1548
      %1585 = vmatprep.subr.mxu0 0.0
      %1586 = vmatpush1.msra.mxu0 %v1549
      %1587 = vmatprep.subr.mxu0 0.0
      %1588 = vmatpush1.msra.mxu0 %v1550
      %1589 = vmatprep.subr.mxu0 0.0
      %1590 = vmatpush1.msra.mxu0 %v1551
      %1591 = vmatprep.subr.mxu0 0.0
      %1592 = vmatpush1.msra.mxu0 0.0
      %1593 = vmatprep.subr.mxu0 0.0
      %1594 = vmatpush1.msra.mxu0 0.0
      %1595 = vmatprep.subr.mxu0 0.0
      %1596 = vmatpush1.msra.mxu0 0.0
      %1597 = vmatprep.subr.mxu0 0.0
      %1598 = vmatpush1.msra.mxu0 0.0
      %1599 = vmatprep.subr.mxu0 0.0
      %1600 = vmatpush1.msra.mxu0 0.0
      %1601 = vmatprep.subr.mxu0 0.0
      %1602 = vmatpush1.msra.mxu0 0.0
      %1603 = vmatprep.subr.mxu0 0.0
      %1604 = vmatpush1.msra.mxu0 0.0
      %1605 = vmatprep.subr.mxu0 0.0
      %1606 = vmatpush1.msra.mxu0 0.0
      %1607 = vmatprep.subr.mxu0 0.0
      %1608 = vmatpush1.msra.mxu0 0.0
      %1609 = vmatprep.subr.mxu0 0.0
      %1610 = vmatpush1.msra.mxu0 0.0
      %1611 = vmatprep.subr.mxu0 0.0
      %1612 = vmatpush1.msra.mxu0 0.0
      %1613 = vmatprep.subr.mxu0 0.0
      %1614 = vmatpush1.msra.mxu0 0.0
      %1615 = vmatprep.subr.mxu0 0.0
      %1616 = vmatpush1.msra.mxu0 0.0
      %1617 = vmatprep.subr.mxu0 0.0
      %1618 = vmatpush1.msra.mxu0 0.0
      %1619 = vmatprep.subr.mxu0 0.0
      %1620 = vmatpush1.msra.mxu0 0.0
      %1621 = vmatprep.subr.mxu0 0.0
      %1622 = vmatpush1.msra.mxu0 0.0
      %1623 = vmatprep.mubr.f32.mxu0 0.0
      %1624 = vmatmul.mubr.f32.gmra.mrb[0].mxu0 %v1535
      %v1625 = vpop.f32.mrb[0].mxu0
      %v1626 = vadd.f32 %v1557, %v1625
      %v1627 = vpop.f32.mrb[0].mxu0
      %1628 = vdwg.mxu0
      %1629 = vst [vmem:[#allocation10] sm:$0xff] %v1626
    $region37: #{tpu_custom_call.1} parent=1 // pred_fallthru
      _
    // Predicated region
    $region38: #{tpu_custom_call.1} parent=1 // pred_check
      _
    $region39: #{tpu_custom_call.1} parent=1 // pred_check_branch
      %1631 = sbr.rel (0) target = $region41
    $region40: #{tpu_custom_call.1} parent=1 // pred_region
      %s1633 = ssub.s32 128, 128
      %1634 = vsyncadd [#allocation6], %s1633
      %s1636 = sshll.u32 [#allocation10], 4
      %s1637 = int_to_ptr.vmem [resolvable:$true] %s1636
      %1639 = dma.vmem_to_hbm [thread:$0]  %s1637, 128, %s4, [#allocation6]
    $region41: #{tpu_custom_call.1} parent=1 // pred_fallthru
      _
    // Predicated region
    $region42: #{tpu_custom_call.1} parent=1 // pred_check
      _
    $region43: #{tpu_custom_call.1} parent=1 // pred_check_branch
      %1641 = sbr.rel (0) target = $region45
    $region44: #{tpu_custom_call.1} parent=1 // pred_region
      %1642 = dma.done [#allocation6], 128
    $region45: #{tpu_custom_call.1} parent=1 // pred_fallthru
      _
    %1643 = vsyncpa [#allocation5], 1
    %1644 = vsyncpa [#allocation8], 1
    %1645 = vsyncpa [#allocation6], 1

</llo_original>
